<compile_context>
chip_gen: v7x
topology: tpu7x:2x2x1
jax: 0.10.0
libtpu: 0.0.40
codegen_flags: <defaults>
</compile_context>

<pallas_src>
import jax
import jax.numpy as jnp
from jax.experimental import pallas as pl
from jax.experimental.pallas import tpu as pltpu


# ----------------------------------------------------------------------------
# small helpers
# ----------------------------------------------------------------------------
def _round_up(x, m):
    return (x + m - 1) // m * m


def _vmem_cap_bytes():
    """~80% of physical VMEM (leaves headroom for compiler-internal scratch)."""
    try:
        cap = int(pltpu.get_tpu_info().vmem_capacity_bytes)
    except Exception:
        cap = 128 << 20          # v5e/v6e default; v7x has 64 MiB
    return int(cap * 4 // 5)


def _vmem_limit(*block_bytes):
    """Scoped-VMEM budget: 2x (double buffering) the live blocks + margin."""
    est = 2 * int(sum(block_bytes)) + (2 << 20)
    return int(min(max(est, 8 << 20), _vmem_cap_bytes()))


# ----------------------------------------------------------------------------
# kernels
# ----------------------------------------------------------------------------
def _embed_kernel(x_ref, we_ref, be_ref, out_ref):
    """out_tile = x_tile @ We + be   (bf16 operands, f32 accumulate)."""
    out_ref[...] = (jnp.dot(x_ref[...], we_ref[...],
                            preferred_element_type=jnp.float32) + be_ref[...])


def _gin_layer_kernel(a_ref, hfull_ref, htile_ref,
                      w1_ref, b1_ref, w2_ref, b2_ref, out_ref):
    """One GIN layer on a row tile (row-tiled fallback path):

        z   = (I + A)_tile @ h_full          # self term + scatter_add fused
        z   = relu(z @ W1 + b1) @ W2 + b2    # the layer's MLP
        out = h_tile + relu(z)               # outer residual of the model

    a_ref is int8 (cast to bf16 here — hides under the MXU); hfull_ref is the
    bf16 full h (cast once in the wrapper); htile_ref is the f32 residual tile.
    """
    f32, bf16 = jnp.float32, jnp.bfloat16
    z = jnp.dot(a_ref[...].astype(bf16), hfull_ref[...],
                preferred_element_type=f32)
    z = jnp.dot(z.astype(bf16), w1_ref[...], preferred_element_type=f32) + b1_ref[...]
    z = jnp.maximum(z, 0.0)
    z = jnp.dot(z.astype(bf16), w2_ref[...], preferred_element_type=f32) + b2_ref[...]
    out_ref[...] = htile_ref[...] + jnp.maximum(z, 0.0)


def _readout_kernel(pool_ref, h_ref, wr1_ref, br1_ref, wr2_ref, br2_ref,
                    out_ref, acc_ref):
    """global_add_pool tiled over node row tiles (reduction grid axis with an
    f32 accumulator scratch), then Linear -> ReLU -> Linear on the last step."""
    f32, bf16 = jnp.float32, jnp.bfloat16

    @pl.when(pl.program_id(0) == 0)
    def _():
        acc_ref[...] = jnp.zeros_like(acc_ref)

    acc_ref[...] += jnp.dot(pool_ref[...], h_ref[...], preferred_element_type=f32)

    @pl.when(pl.program_id(0) == pl.num_programs(0) - 1)
    def _():
        r = jnp.dot(acc_ref[...].astype(bf16), wr1_ref[...],
                    preferred_element_type=f32) + br1_ref[...]
        r = jnp.maximum(r, 0.0)
        out_ref[...] = jnp.dot(r.astype(bf16), wr2_ref[...],
                               preferred_element_type=f32) + br2_ref[...]


def _gin_fused_kernel(x_ref, adj_ref, pool_ref, we_ref, be_ref,
                      w1_ref, b1_ref, w2_ref, b2_ref,
                      wr1_ref, br1_ref, wr2_ref, br2_ref,
                      out_ref, h_scr):
    """Fully fused forward for small/medium graphs.

    grid = (L,) "arbitrary"; weights stream per layer; h lives in the f32 VMEM
    scratch h_scr across layer steps (no HBM round trips, no per-layer launch).
    """
    f32, bf16 = jnp.float32, jnp.bfloat16
    l = pl.program_id(0)

    @pl.when(l == 0)
    def _():
        h_scr[...] = (jnp.dot(x_ref[...], we_ref[...],
                              preferred_element_type=f32) + be_ref[...])

    h = h_scr[...]
    hb = h.astype(bf16)
    z = jnp.dot(adj_ref[...].astype(bf16), hb, preferred_element_type=f32)
    z = jnp.dot(z.astype(bf16), w1_ref[0], preferred_element_type=f32) + b1_ref[0]
    z = jnp.maximum(z, 0.0)
    z = jnp.dot(z.astype(bf16), w2_ref[0], preferred_element_type=f32) + b2_ref[0]
    h_scr[...] = h + jnp.maximum(z, 0.0)

    @pl.when(l == pl.num_programs(0) - 1)
    def _():
        hg = jnp.dot(pool_ref[...], h_scr[...].astype(bf16),
                     preferred_element_type=f32)
        r = jnp.dot(hg.astype(bf16), wr1_ref[...],
                    preferred_element_type=f32) + br1_ref[...]
        r = jnp.maximum(r, 0.0)
        out_ref[...] = jnp.dot(r.astype(bf16), wr2_ref[...],
                               preferred_element_type=f32) + br2_ref[...]


# ----------------------------------------------------------------------------
# wrapper
# ----------------------------------------------------------------------------
def gin_forward(x, edge_index, batch, params, num_graphs, *,
                row_tile=256, fuse_layers=None):
    f32, bf16 = jnp.float32, jnp.bfloat16
    N, F = x.shape
    H = params["we"].shape[1]
    Hh = params["wr1"].shape[1]
    L = params["w1"].shape[0]
    G = num_graphs

    if H % 128 != 0:
        raise ValueError("num_hidden must be a multiple of 128 (lane-narrow "
                         "hidden dims waste MXU width); pad the weights.")

    # Pad node count to the row tile; feature dim stays un-padded (full-dim
    # blocks are legal and 8x cheaper to DMA than padding 16 -> 128).
    tm = row_tile if N >= row_tile else _round_up(max(N, 8), 8)
    Np = _round_up(N, tm)
    n_tiles = Np // tm

    # bf16 matmul operands built once in the wrapper.
    x_bf = jnp.zeros((Np, F), bf16).at[:N, :].set(x.astype(bf16))

    send, rec = edge_index[0], edge_index[1]
    # (I + A) with A[rec, send] += multiplicity, stored as int8 (halves the
    # dominant HBM stream at scale; counts up to 127 are exact).  One MXU pass
    # then yields h + scatter_add(h[send], rec).  Padded rows (>= N) only tie
    # to themselves via I; they never feed real nodes or the pool — benign.
    adj_i8 = (jnp.zeros((Np, Np), jnp.int32)
              .at[rec, send].add(1)
              .at[jnp.arange(Np), jnp.arange(Np)].add(1)
              .astype(jnp.int8))
    # global_add_pool as a one-hot (G, Np) matmul; 0/1 entries exact in bf16.
    pool_bf = (jnp.zeros((G, Np), f32)
               .at[batch, jnp.arange(N)].add(1.0)
               .astype(bf16))

    we = params["we"].astype(bf16)
    be = params["be"].astype(f32)
    w1 = params["w1"].astype(bf16)
    b1 = params["b1"].astype(f32)
    w2 = params["w2"].astype(bf16)
    b2 = params["b2"].astype(f32)
    wr1 = params["wr1"].astype(bf16)
    br1 = params["br1"].astype(f32)
    wr2 = params["wr2"].astype(bf16)
    br2 = params["br2"].astype(f32)

    # Working set of the fused kernel (whole graph resident in VMEM).
    fused_bytes = (Np * Np + Np * H * 4 + Np * F * 2 + G * Np * 2
                   + F * H * 2 + 2 * H * H * 2 + H * Hh * 2)
    if fuse_layers is None:
        fuse_layers = (2 * fused_bytes + (4 << 20)) <= min(
            24 << 20, _vmem_cap_bytes() // 2)

    if fuse_layers:
        # ---- single fused pallas_call: embed + L layers + pool + readout ----
        out = pl.pallas_call(
            _gin_fused_kernel,
            out_shape=jax.ShapeDtypeStruct((G, 1), f32),
            grid=(L,),
            in_specs=[
                pl.BlockSpec((Np, F), lambda l: (0, 0)),        # x (bf16)
                pl.BlockSpec((Np, Np), lambda l: (0, 0)),       # I+A (int8)
                pl.BlockSpec((G, Np), lambda l: (0, 0)),        # pool (bf16)
                pl.BlockSpec((F, H), lambda l: (0, 0)),         # We
                pl.BlockSpec((1, H), lambda l: (0, 0)),         # be
                pl.BlockSpec((1, H, H), lambda l: (l, 0, 0)),   # W1[l]
                pl.BlockSpec((1, 1, H), lambda l: (l, 0, 0)),   # b1[l]
                pl.BlockSpec((1, H, H), lambda l: (l, 0, 0)),   # W2[l]
                pl.BlockSpec((1, 1, H), lambda l: (l, 0, 0)),   # b2[l]
                pl.BlockSpec((H, Hh), lambda l: (0, 0)),        # Wr1
                pl.BlockSpec((1, Hh), lambda l: (0, 0)),        # br1
                pl.BlockSpec((Hh, 1), lambda l: (0, 0)),        # Wr2
                pl.BlockSpec((1, 1), lambda l: (0, 0)),         # br2
            ],
            out_specs=pl.BlockSpec((G, 1), lambda l: (0, 0)),
            scratch_shapes=[pltpu.VMEM((Np, H), f32)],
            compiler_params=pltpu.CompilerParams(
                dimension_semantics=("arbitrary",),
                vmem_limit_bytes=_vmem_limit(fused_bytes)),
            cost_estimate=pl.CostEstimate(
                flops=2 * L * (Np * Np * H + 2 * Np * H * H),
                transcendentals=0,
                bytes_accessed=(Np * Np + Np * F * 2 + G * Np * 2
                                + 2 * L * H * H * 2 + G * 4)),
        )(x_bf, adj_i8, pool_bf, we, be, w1, b1, w2, b2, wr1, br1, wr2, br2)
        return out.squeeze()

    # ---- row-tiled streaming path (scales past VMEM) ----
    grid = (n_tiles,)

    # h_embed: Linear(feat_in -> H), row-tiled, parallel over TensorCores.
    h = pl.pallas_call(
        _embed_kernel,
        out_shape=jax.ShapeDtypeStruct((Np, H), f32),
        grid=grid,
        in_specs=[
            pl.BlockSpec((tm, F), lambda i: (i, 0)),
            pl.BlockSpec((F, H), lambda i: (0, 0)),
            pl.BlockSpec((1, H), lambda i: (0, 0)),
        ],
        out_specs=pl.BlockSpec((tm, H), lambda i: (i, 0)),
        compiler_params=pltpu.CompilerParams(
            dimension_semantics=("parallel",),
            vmem_limit_bytes=_vmem_limit(tm * F * 2, F * H * 2,
                                         H * 4, tm * H * 4)),
    )(x_bf, we, be)

    # GIN layers: h <- h + relu(MLP((I + A) @ h)); weights streamed per layer,
    # adjacency row-tiled (int8), full h resident as bf16.
    layer_call = pl.pallas_call(
        _gin_layer_kernel,
        out_shape=jax.ShapeDtypeStruct((Np, H), f32),
        grid=grid,
        in_specs=[
            pl.BlockSpec((tm, Np), lambda i: (i, 0)),    # (I+A) row tile, int8
            pl.BlockSpec((Np, H), lambda i: (0, 0)),     # full h, bf16
            pl.BlockSpec((tm, H), lambda i: (i, 0)),     # h row tile, f32
            pl.BlockSpec((H, H), lambda i: (0, 0)),
            pl.BlockSpec((1, H), lambda i: (0, 0)),
            pl.BlockSpec((H, H), lambda i: (0, 0)),
            pl.BlockSpec((1, H), lambda i: (0, 0)),
        ],
        out_specs=pl.BlockSpec((tm, H), lambda i: (i, 0)),
        compiler_params=pltpu.CompilerParams(
            dimension_semantics=("parallel",),
            vmem_limit_bytes=_vmem_limit(tm * Np, Np * H * 2, tm * H * 4,
                                         2 * H * H * 2, 2 * H * 4, tm * H * 4)),
        cost_estimate=pl.CostEstimate(
            flops=2 * Np * Np * H + 4 * Np * H * H, transcendentals=0,
            bytes_accessed=Np * Np + Np * H * 2 + 2 * Np * H * 4 + 2 * H * H * 2),
    )
    for l in range(L):
        # bf16 copy of h made ONCE per layer here (not per row tile in-kernel).
        h = layer_call(adj_i8, h.astype(bf16), h, w1[l], b1[l], w2[l], b2[l])

    # global_add_pool + readout MLP, tiled over node row tiles (reduction axis
    # with an accumulator scratch; h fed as bf16).
    out = pl.pallas_call(
        _readout_kernel,
        out_shape=jax.ShapeDtypeStruct((G, 1), f32),
        grid=grid,
        in_specs=[
            pl.BlockSpec((G, tm), lambda i: (0, i)),
            pl.BlockSpec((tm, H), lambda i: (i, 0)),
            pl.BlockSpec((H, Hh), lambda i: (0, 0)),
            pl.BlockSpec((1, Hh), lambda i: (0, 0)),
            pl.BlockSpec((Hh, 1), lambda i: (0, 0)),
            pl.BlockSpec((1, 1), lambda i: (0, 0)),
        ],
        out_specs=pl.BlockSpec((G, 1), lambda i: (0, 0)),
        scratch_shapes=[pltpu.VMEM((G, H), f32)],
        compiler_params=pltpu.CompilerParams(
            dimension_semantics=("arbitrary",),
            vmem_limit_bytes=_vmem_limit(G * tm * 2, tm * H * 2, H * Hh * 2,
                                         Hh * 4, Hh * 2, 4, G * 4, G * H * 4)),
    )(pool_bf, h.astype(bf16), wr1, br1, wr2, br2)

    return out.squeeze()   # matches .squeeze() in the torch module


# ----------------------------------------------------------------------------
# parameters + reference
# ----------------------------------------------------------------------------
def init_params(key, feat_in, num_hidden, num_layers):
    """Deterministic synthetic parameters (shapes match the torch module)."""
    H, Hh = num_hidden, num_hidden // 2
    ks = jax.random.split(key, 8)
    s = 0.1
    return {
        "we": s * jax.random.normal(ks[0], (feat_in, H), jnp.float32),
        "be": s * jax.random.normal(ks[1], (1, H), jnp.float32),
        "w1": s * jax.random.normal(ks[2], (num_layers, H, H), jnp.float32),
        "b1": s * jax.random.normal(ks[3], (num_layers, 1, H), jnp.float32),
        "w2": s * jax.random.normal(ks[4], (num_layers, H, H), jnp.float32),
        "b2": s * jax.random.normal(ks[5], (num_layers, 1, H), jnp.float32),
        "wr1": s * jax.random.normal(ks[6], (H, Hh), jnp.float32),
        "br1": jnp.zeros((1, Hh), jnp.float32),
        "wr2": s * jax.random.normal(ks[7], (Hh, 1), jnp.float32),
        "br2": jnp.zeros((1, 1), jnp.float32),
    }


def gin_reference(x, edge_index, batch, params, num_graphs):
    """Plain-JAX reference with the torch GIN semantics (gather + scatter_add,
    global_add_pool).  Mirrors the kernel's mixed precision (bf16 matmul
    operands, f32 accumulation / elementwise) so the comparison isolates the
    structural correctness of the dense-adjacency / pooling formulation."""
    f32, bf16 = jnp.float32, jnp.bfloat16

    def mm(a, b):
        return jnp.dot(a.astype(bf16), b.astype(bf16), preferred_element_type=f32)

    send, rec = edge_index[0], edge_index[1]
    h = mm(x, params["we"]) + params["be"]
    for l in range(params["w1"].shape[0]):
        hb = h.astype(bf16).astype(f32)
        agg = jnp.zeros_like(h).at[rec].add(hb[send])
        z = hb + agg
        z = jnp.maximum(mm(z, params["w1"][l]) + params["b1"][l], 0.0)
        z = mm(z, params["w2"][l]) + params["b2"][l]
        h = h + jnp.maximum(z, 0.0)
    hb = h.astype(bf16).astype(f32)
    h_agg = jnp.zeros((num_graphs, h.shape[1]), f32).at[batch].add(hb)
    r = jnp.maximum(mm(h_agg, params["wr1"]) + params["br1"], 0.0)
    return (mm(r, params["wr2"]) + params["br2"]).squeeze()


# ----------------------------------------------------------------------------
# demo
# ----------------------------------------------------------------------------
if __name__ == "__main__":
    key = jax.random.PRNGKey(0)
    k_feat, k_edge, k_par = jax.random.split(key, 3)

    # Small synthetic graph batch.  num_hidden = 128 (lane-aligned).
    N = 256            # nodes
    E = 512            # edges
    feat_in = 16
    num_hidden = 128
    num_layers = 3
    num_graphs = 2

    x = jax.random.normal(k_feat, (N, feat_in), jnp.float32)
    edge_index = jax.random.randint(k_edge, (2, E), 0, N, dtype=jnp.int32)
    batch = (jnp.arange(N) * num_graphs // N).astype(jnp.int32)

    params = init_params(k_par, feat_in, num_hidden, num_layers)

    ref = gin_reference(x, edge_index, batch, params, num_graphs)

    # Fused single-call path (demo-scale graphs: everything VMEM-resident).
    out_fused = jax.block_until_ready(
        gin_forward(x, edge_index, batch, params, num_graphs, fuse_layers=True))
    # Row-tiled streaming path (for graphs whose (I+A) exceeds VMEM).
    out_tiled = jax.block_until_ready(
        gin_forward(x, edge_index, batch, params, num_graphs, fuse_layers=False))

    assert out_fused.shape == out_tiled.shape == ref.shape == (num_graphs,)
    assert jnp.allclose(out_fused, ref, rtol=1e-2, atol=1e-2), (out_fused, ref)
    assert jnp.allclose(out_tiled, ref, rtol=1e-2, atol=1e-2), (out_tiled, ref)

    print("KERNEL_OK")
</pallas_src>

<mosaic_0001>
module attributes {stable_mosaic.version = 11 : i64} {
  func.func @_gin_fused_kernel(%arg0: i32, %arg1: memref<256x16xbf16, #tpu.memory_space<vmem>>, %arg2: memref<256x256xi8, #tpu.memory_space<vmem>>, %arg3: memref<2x256xbf16, #tpu.memory_space<vmem>>, %arg4: memref<16x128xbf16, #tpu.memory_space<vmem>>, %arg5: memref<1x128xf32, #tpu.memory_space<vmem>>, %arg6: memref<1x128x128xbf16, #tpu.memory_space<vmem>>, %arg7: memref<1x1x128xf32, #tpu.memory_space<vmem>>, %arg8: memref<1x128x128xbf16, #tpu.memory_space<vmem>>, %arg9: memref<1x1x128xf32, #tpu.memory_space<vmem>>, %arg10: memref<128x64xbf16, #tpu.memory_space<vmem>>, %arg11: memref<1x64xf32, #tpu.memory_space<vmem>>, %arg12: memref<64x1xbf16, #tpu.memory_space<vmem>>, %arg13: memref<1x1xf32, #tpu.memory_space<vmem>>, %arg14: memref<2x1xf32, #tpu.memory_space<vmem>>, %arg15: memref<256x128xf32, #tpu.memory_space<vmem>>) attributes {dimension_semantics = [#tpu.dimension_semantics<arbitrary>], iteration_bounds = array<i64: 3>, scalar_prefetch = 0 : i64, scratch_operands = 1 : i64, tpu.core_type = #tpu.core_type<tc>, window_params = [{pipeline_mode = #tpu.pipeline_mode<synchronous>, transform_indices = @transform_0, window_bounds = array<i64: 256, 16>}, {pipeline_mode = #tpu.pipeline_mode<synchronous>, transform_indices = @transform_1, window_bounds = array<i64: 256, 256>}, {pipeline_mode = #tpu.pipeline_mode<synchronous>, transform_indices = @transform_2, window_bounds = array<i64: 2, 256>}, {pipeline_mode = #tpu.pipeline_mode<synchronous>, transform_indices = @transform_3, window_bounds = array<i64: 16, 128>}, {pipeline_mode = #tpu.pipeline_mode<synchronous>, transform_indices = @transform_4, window_bounds = array<i64: 1, 128>}, {transform_indices = @transform_5, window_bounds = array<i64: 1, 128, 128>}, {transform_indices = @transform_6, window_bounds = array<i64: 1, 1, 128>}, {transform_indices = @transform_7, window_bounds = array<i64: 1, 128, 128>}, {transform_indices = @transform_8, window_bounds = array<i64: 1, 1, 128>}, {pipeline_mode = #tpu.pipeline_mode<synchronous>, transform_indices = @transform_9, window_bounds = array<i64: 128, 64>}, {pipeline_mode = #tpu.pipeline_mode<synchronous>, transform_indices = @transform_10, window_bounds = array<i64: 1, 64>}, {pipeline_mode = #tpu.pipeline_mode<synchronous>, transform_indices = @transform_11, window_bounds = array<i64: 64, 1>}, {pipeline_mode = #tpu.pipeline_mode<synchronous>, transform_indices = @transform_12, window_bounds = array<i64: 1, 1>}, {pipeline_mode = #tpu.pipeline_mode<synchronous>, transform_indices = @transform_13, window_bounds = array<i64: 2, 1>}]} {
    %c0_i32 = arith.constant 0 : i32
    %0 = arith.cmpi eq, %arg0, %c0_i32 : i32
    %1 = arith.extui %0 : i1 to i32
    %c0_i32_0 = arith.constant 0 : i32
    %2 = arith.cmpi ne, %1, %c0_i32_0 : i32
    scf.if %2 {
      %c0_23 = arith.constant 0 : index
      %c0_24 = arith.constant 0 : index
      %33 = vector.load %arg1[%c0_23, %c0_24] : memref<256x16xbf16, #tpu.memory_space<vmem>>, vector<256x16xbf16>
      %c0_25 = arith.constant 0 : index
      %c0_26 = arith.constant 0 : index
      %34 = vector.load %arg4[%c0_25, %c0_26] : memref<16x128xbf16, #tpu.memory_space<vmem>>, vector<16x128xbf16>
      %cst_27 = arith.constant dense<0.000000e+00> : vector<256x128xf32>
      %35 = tpu.matmul %33, %34, %cst_27 {dimension_numbers = #tpu.dot_dimension_numbers<[1], [0], [0], [1], [0, 0, 1, 1], [], []>} : vector<256x16xbf16>, vector<16x128xbf16>, vector<256x128xf32> -> vector<256x128xf32>
      %c0_28 = arith.constant 0 : index
      %c0_29 = arith.constant 0 : index
      %36 = vector.load %arg5[%c0_28, %c0_29] : memref<1x128xf32, #tpu.memory_space<vmem>>, vector<1x128xf32>
      %37 = vector.broadcast %36 : vector<1x128xf32> to vector<256x128xf32>
      %38 = arith.addf %35, %37 : vector<256x128xf32>
      %c0_30 = arith.constant 0 : index
      %c0_31 = arith.constant 0 : index
      %39 = vector.load %arg15[%c0_30, %c0_31] : memref<256x128xf32, #tpu.memory_space<vmem>>, vector<256x128xf32>
      tpu.vector_store %arg15[%c0_30, %c0_31], %38 {strides = array<i32>} : memref<256x128xf32, #tpu.memory_space<vmem>>, vector<256x128xf32>,
    } else {
    }
    %c0 = arith.constant 0 : index
    %c0_1 = arith.constant 0 : index
    %3 = vector.load %arg15[%c0, %c0_1] : memref<256x128xf32, #tpu.memory_space<vmem>>, vector<256x128xf32>
    %4 = arith.truncf %3 : vector<256x128xf32> to vector<256x128xbf16>
    %c0_2 = arith.constant 0 : index
    %c0_3 = arith.constant 0 : index
    %5 = vector.load %arg2[%c0_2, %c0_3] : memref<256x256xi8, #tpu.memory_space<vmem>>, vector<256x256xi8>
    %6 = arith.sitofp %5 : vector<256x256xi8> to vector<256x256xbf16>
    %cst = arith.constant dense<0.000000e+00> : vector<256x128xf32>
    %7 = tpu.matmul %6, %4, %cst {dimension_numbers = #tpu.dot_dimension_numbers<[1], [0], [0], [1], [0, 0, 1, 1], [], []>} : vector<256x256xbf16>, vector<256x128xbf16>, vector<256x128xf32> -> vector<256x128xf32>
    %8 = arith.truncf %7 : vector<256x128xf32> to vector<256x128xbf16>
    %c0_4 = arith.constant 0 : index
    %c0_5 = arith.constant 0 : index
    %c0_6 = arith.constant 0 : index
    %9 = vector.load %arg6[%c0_4, %c0_5, %c0_6] : memref<1x128x128xbf16, #tpu.memory_space<vmem>>, vector<1x128x128xbf16>
    %10 = vector.shape_cast %9 : vector<1x128x128xbf16> to vector<128x128xbf16>
    %cst_7 = arith.constant dense<0.000000e+00> : vector<256x128xf32>
    %11 = tpu.matmul %8, %10, %cst_7 {dimension_numbers = #tpu.dot_dimension_numbers<[1], [0], [0], [1], [0, 0, 1, 1], [], []>} : vector<256x128xbf16>, vector<128x128xbf16>, vector<256x128xf32> -> vector<256x128xf32>
    %c0_8 = arith.constant 0 : index
    %c0_9 = arith.constant 0 : index
    %c0_10 = arith.constant 0 : index
    %12 = vector.load %arg7[%c0_8, %c0_9, %c0_10] : memref<1x1x128xf32, #tpu.memory_space<vmem>>, vector<1x1x128xf32>
    %13 = vector.shape_cast %12 : vector<1x1x128xf32> to vector<1x128xf32>
    %14 = vector.broadcast %13 : vector<1x128xf32> to vector<256x128xf32>
    %15 = arith.addf %11, %14 : vector<256x128xf32>
    %cst_11 = arith.constant 0.000000e+00 : f32
    %16 = vector.broadcast %cst_11 : f32 to vector<256x128xf32>
    %17 = arith.maximumf %15, %16 : vector<256x128xf32>
    %18 = arith.truncf %17 : vector<256x128xf32> to vector<256x128xbf16>
    %c0_12 = arith.constant 0 : index
    %c0_13 = arith.constant 0 : index
    %c0_14 = arith.constant 0 : index
    %19 = vector.load %arg8[%c0_12, %c0_13, %c0_14] : memref<1x128x128xbf16, #tpu.memory_space<vmem>>, vector<1x128x128xbf16>
    %20 = vector.shape_cast %19 : vector<1x128x128xbf16> to vector<128x128xbf16>
    %cst_15 = arith.constant dense<0.000000e+00> : vector<256x128xf32>
    %21 = tpu.matmul %18, %20, %cst_15 {dimension_numbers = #tpu.dot_dimension_numbers<[1], [0], [0], [1], [0, 0, 1, 1], [], []>} : vector<256x128xbf16>, vector<128x128xbf16>, vector<256x128xf32> -> vector<256x128xf32>
    %c0_16 = arith.constant 0 : index
    %c0_17 = arith.constant 0 : index
    %c0_18 = arith.constant 0 : index
    %22 = vector.load %arg9[%c0_16, %c0_17, %c0_18] : memref<1x1x128xf32, #tpu.memory_space<vmem>>, vector<1x1x128xf32>
    %23 = vector.shape_cast %22 : vector<1x1x128xf32> to vector<1x128xf32>
    %24 = vector.broadcast %23 : vector<1x128xf32> to vector<256x128xf32>
    %25 = arith.addf %21, %24 : vector<256x128xf32>
    %cst_19 = arith.constant 0.000000e+00 : f32
    %26 = vector.broadcast %cst_19 : f32 to vector<256x128xf32>
    %27 = arith.maximumf %25, %26 : vector<256x128xf32>
    %28 = arith.addf %3, %27 : vector<256x128xf32>
    %c0_20 = arith.constant 0 : index
    %c0_21 = arith.constant 0 : index
    %29 = vector.load %arg15[%c0_20, %c0_21] : memref<256x128xf32, #tpu.memory_space<vmem>>, vector<256x128xf32>
    tpu.vector_store %arg15[%c0_20, %c0_21], %28 {strides = array<i32>} : memref<256x128xf32, #tpu.memory_space<vmem>>, vector<256x128xf32>,
    %c2_i32 = arith.constant 2 : i32
    %30 = arith.cmpi eq, %arg0, %c2_i32 : i32
    %31 = arith.extui %30 : i1 to i32
    %c0_i32_22 = arith.constant 0 : i32
    %32 = arith.cmpi ne, %31, %c0_i32_22 : i32
    scf.if %32 {
      %c0_23 = arith.constant 0 : index
      %c0_24 = arith.constant 0 : index
      %33 = vector.load %arg3[%c0_23, %c0_24] : memref<2x256xbf16, #tpu.memory_space<vmem>>, vector<2x256xbf16>
      %c0_25 = arith.constant 0 : index
      %c0_26 = arith.constant 0 : index
      %34 = vector.load %arg15[%c0_25, %c0_26] : memref<256x128xf32, #tpu.memory_space<vmem>>, vector<256x128xf32>
      %35 = arith.truncf %34 : vector<256x128xf32> to vector<256x128xbf16>
      %cst_27 = arith.constant dense<0.000000e+00> : vector<2x128xf32>
      %36 = tpu.matmul %33, %35, %cst_27 {dimension_numbers = #tpu.dot_dimension_numbers<[1], [0], [0], [1], [0, 0, 1, 1], [], []>} : vector<2x256xbf16>, vector<256x128xbf16>, vector<2x128xf32> -> vector<2x128xf32>
      %37 = arith.truncf %36 : vector<2x128xf32> to vector<2x128xbf16>
      %c0_28 = arith.constant 0 : index
      %c0_29 = arith.constant 0 : index
      %38 = vector.load %arg10[%c0_28, %c0_29] : memref<128x64xbf16, #tpu.memory_space<vmem>>, vector<128x64xbf16>
      %cst_30 = arith.constant dense<0.000000e+00> : vector<2x64xf32>
      %39 = tpu.matmul %37, %38, %cst_30 {dimension_numbers = #tpu.dot_dimension_numbers<[1], [0], [0], [1], [0, 0, 1, 1], [], []>} : vector<2x128xbf16>, vector<128x64xbf16>, vector<2x64xf32> -> vector<2x64xf32>
      %c0_31 = arith.constant 0 : index
      %c0_32 = arith.constant 0 : index
      %40 = vector.load %arg11[%c0_31, %c0_32] : memref<1x64xf32, #tpu.memory_space<vmem>>, vector<1x64xf32>
      %41 = vector.broadcast %40 : vector<1x64xf32> to vector<2x64xf32>
      %42 = arith.addf %39, %41 : vector<2x64xf32>
      %cst_33 = arith.constant 0.000000e+00 : f32
      %43 = vector.broadcast %cst_33 : f32 to vector<2x64xf32>
      %44 = arith.maximumf %42, %43 : vector<2x64xf32>
      %45 = arith.truncf %44 : vector<2x64xf32> to vector<2x64xbf16>
      %c0_34 = arith.constant 0 : index
      %c0_35 = arith.constant 0 : index
      %46 = vector.load %arg12[%c0_34, %c0_35] : memref<64x1xbf16, #tpu.memory_space<vmem>>, vector<64x1xbf16>
      %cst_36 = arith.constant dense<0.000000e+00> : vector<2x1xf32>
      %47 = tpu.matmul %45, %46, %cst_36 {dimension_numbers = #tpu.dot_dimension_numbers<[1], [0], [0], [1], [0, 0, 1, 1], [], []>} : vector<2x64xbf16>, vector<64x1xbf16>, vector<2x1xf32> -> vector<2x1xf32>
      %c0_37 = arith.constant 0 : index
      %c0_38 = arith.constant 0 : index
      %48 = vector.load %arg13[%c0_37, %c0_38] : memref<1x1xf32, #tpu.memory_space<vmem>>, vector<1x1xf32>
      %49 = vector.broadcast %48 : vector<1x1xf32> to vector<2x1xf32>
      %50 = arith.addf %47, %49 : vector<2x1xf32>
      %c0_39 = arith.constant 0 : index
      %c0_40 = arith.constant 0 : index
      %51 = vector.load %arg14[%c0_39, %c0_40] : memref<2x1xf32, #tpu.memory_space<vmem>>, vector<2x1xf32>
      tpu.vector_store %arg14[%c0_39, %c0_40], %50 {strides = array<i32>} : memref<2x1xf32, #tpu.memory_space<vmem>>, vector<2x1xf32>,
    } else {
    }
    return
  }
  func.func @transform_0(%arg0: i32) -> (i32, i32) {
    %c0_i32 = arith.constant 0 : i32
    %c0_i32_0 = arith.constant 0 : i32
    %c0_i32_1 = arith.constant 0 : i32
    return %c0_i32, %c0_i32_0 : i32, i32
  }
  func.func @transform_1(%arg0: i32) -> (i32, i32) {
    %c0_i32 = arith.constant 0 : i32
    %c0_i32_0 = arith.constant 0 : i32
    %c0_i32_1 = arith.constant 0 : i32
    return %c0_i32, %c0_i32_0 : i32, i32
  }
  func.func @transform_2(%arg0: i32) -> (i32, i32) {
    %c0_i32 = arith.constant 0 : i32
    %c0_i32_0 = arith.constant 0 : i32
    %c0_i32_1 = arith.constant 0 : i32
    return %c0_i32, %c0_i32_0 : i32, i32
  }
  func.func @transform_3(%arg0: i32) -> (i32, i32) {
    %c0_i32 = arith.constant 0 : i32
    %c0_i32_0 = arith.constant 0 : i32
    %c0_i32_1 = arith.constant 0 : i32
    return %c0_i32, %c0_i32_0 : i32, i32
  }
  func.func @transform_4(%arg0: i32) -> (i32, i32) {
    %c0_i32 = arith.constant 0 : i32
    %c0_i32_0 = arith.constant 0 : i32
    %c0_i32_1 = arith.constant 0 : i32
    return %c0_i32, %c0_i32_0 : i32, i32
  }
  func.func @transform_5(%arg0: i32) -> (i32, i32, i32) {
    %c0_i32 = arith.constant 0 : i32
    %c0_i32_0 = arith.constant 0 : i32
    %c0_i32_1 = arith.constant 0 : i32
    return %arg0, %c0_i32, %c0_i32_0 : i32, i32, i32
  }
  func.func @transform_6(%arg0: i32) -> (i32, i32, i32) {
    %c0_i32 = arith.constant 0 : i32
    %c0_i32_0 = arith.constant 0 : i32
    %c0_i32_1 = arith.constant 0 : i32
    return %arg0, %c0_i32, %c0_i32_0 : i32, i32, i32
  }
  func.func @transform_7(%arg0: i32) -> (i32, i32, i32) {
    %c0_i32 = arith.constant 0 : i32
    %c0_i32_0 = arith.constant 0 : i32
    %c0_i32_1 = arith.constant 0 : i32
    return %arg0, %c0_i32, %c0_i32_0 : i32, i32, i32
  }
  func.func @transform_8(%arg0: i32) -> (i32, i32, i32) {
    %c0_i32 = arith.constant 0 : i32
    %c0_i32_0 = arith.constant 0 : i32
    %c0_i32_1 = arith.constant 0 : i32
    return %arg0, %c0_i32, %c0_i32_0 : i32, i32, i32
  }
  func.func @transform_9(%arg0: i32) -> (i32, i32) {
    %c0_i32 = arith.constant 0 : i32
    %c0_i32_0 = arith.constant 0 : i32
    %c0_i32_1 = arith.constant 0 : i32
    return %c0_i32, %c0_i32_0 : i32, i32
  }
  func.func @transform_10(%arg0: i32) -> (i32, i32) {
    %c0_i32 = arith.constant 0 : i32
    %c0_i32_0 = arith.constant 0 : i32
    %c0_i32_1 = arith.constant 0 : i32
    return %c0_i32, %c0_i32_0 : i32, i32
  }
  func.func @transform_11(%arg0: i32) -> (i32, i32) {
    %c0_i32 = arith.constant 0 : i32
    %c0_i32_0 = arith.constant 0 : i32
    %c0_i32_1 = arith.constant 0 : i32
    return %c0_i32, %c0_i32_0 : i32, i32
  }
  func.func @transform_12(%arg0: i32) -> (i32, i32) {
    %c0_i32 = arith.constant 0 : i32
    %c0_i32_0 = arith.constant 0 : i32
    %c0_i32_1 = arith.constant 0 : i32
    return %c0_i32, %c0_i32_0 : i32, i32
  }
  func.func @transform_13(%arg0: i32) -> (i32, i32) {
    %c0_i32 = arith.constant 0 : i32
    %c0_i32_0 = arith.constant 0 : i32
    %c0_i32_1 = arith.constant 0 : i32
    return %c0_i32, %c0_i32_0 : i32, i32
  }
}

</mosaic_0001>

<llo_original>
// kernel: tpu_custom_call.1
$region0: #{tpu_custom_call.1}
  #allocation0 [shape = 'u32[]', space=smem, size = 0x4, offset = 0x4, fixed_abs, tag = 'smem constant byte address 0x4 - core index']
  #allocation1 [shape = 'u32[144,128]{1,0:T(1,128)}', space=vmem, size = 0x12000, scoped, tag = 'internal scratch']
  #allocation2 [shape = 'f32[256,128]{1,0:T(8,128)}', space=vmem, size = 0x20000, scoped, tag = 'scratch operand']
  #allocation3 [shape = 'f32[1,1]{1,0:T(1,128)S(1)}', space=vmem, size = 0x200, scoped, tag = 'scoped memory for tpu_custom_call.1']
  %s0 = inlined_call_operand.vmem [shape: bf16[256,16], index: 0, kind: input, shape index: {}]
  %s1 = inlined_call_operand.hbm [shape: s8[256,256], index: 1, kind: input, shape index: {}]
  %s2 = inlined_call_operand.vmem [shape: bf16[2,256], index: 2, kind: input, shape index: {}]
  %s3 = inlined_call_operand.vmem [shape: bf16[16,128], index: 3, kind: input, shape index: {}]
  %s4 = inlined_call_operand.vmem [shape: f32[1,128], index: 4, kind: input, shape index: {}]
  %s5 = inlined_call_operand.vmem [shape: bf16[3,128,128], index: 5, kind: input, shape index: {}]
  %s6 = inlined_call_operand.vmem [shape: f32[3,1,128], index: 6, kind: input, shape index: {}]
  %s7 = inlined_call_operand.hbm [shape: bf16[3,128,128], index: 7, kind: input, shape index: {}]
  %s8 = inlined_call_operand.vmem [shape: f32[3,1,128], index: 8, kind: input, shape index: {}]
  %s9 = inlined_call_operand.vmem [shape: bf16[128,64], index: 9, kind: input, shape index: {}]
  %s10 = inlined_call_operand.vmem [shape: f32[1,64], index: 10, kind: input, shape index: {}]
  %s11 = inlined_call_operand.vmem [shape: bf16[64,1], index: 11, kind: input, shape index: {}]
  %s12 = inlined_call_operand.<no memory space> [shape: f32[1,1], index: 12, kind: input, shape index: {}]
  %s13 = inlined_call_operand.vmem [shape: f32[2,1], index: 13, kind: output, shape index: {}]
  %s14 = sld [smem:[#allocation0]]
  $region101: #{tpu_custom_call.1} parent=0
    _
  %s16 = ssub.s32 1, %s14
  %s17 = scalar_select 0, %s16, %s14
  %v18 = vstv %s12
  %19 = vst [vmem:[#allocation3] sm:$0x1] %v18
  $region1: #{tpu_custom_call.1} parent=0
    #allocation4 [shape = 'u8[65536]{0}', space=vmem, size = 0x10000, scoped, tag = 'input window, operand 1, single buffered']
    #allocation5 [shape = 's32[2]{0}', space=sflag, size = 0x8, scoped, tag = 'scoped memory for tpu_custom_call.1']
    #allocation6 [shape = 'u8[65536]{0}', space=vmem, size = 0x10000, scoped, tag = 'input window, operand 7']
    #allocation7 [shape = 's32[2]{0}', space=sflag, size = 0x8, scoped, tag = 'scoped memory for tpu_custom_call.1']
    %20 = vsyncpa [#allocation5], 0
    %21 = vsyncpa [#allocation7], 0
    %s22 = scalar_lea.sflag [#allocation7], 1
    %23 = vsyncpa %s22, 0
    loop: start=0, step=1, limit=5
    $region2: #{tpu_custom_call.1} parent=1 // loop_pre_header
      _
    $region3: #{tpu_custom_call.1} parent=1 // loop_header
      %s25 = sphi 0, %s29
      %p26 = scmp.ge.s32.totalorder %s25, 5
      %s33 = sphi 0, %s33
      %s35 = sphi 0, %s33
      %s36 = sphi 0, %s35
      %s50 = sphi 0, %s36
      %s54 = sphi 0, %s54
      %s56 = sphi 0, %s54
      %s57 = sphi 0, %s56
      %s71 = sphi 0, %s57
      %s75 = sphi 0, %s75
      %s77 = sphi 0, %s75
      %s78 = sphi 0, %s77
      %s92 = sphi 0, %s78
      %s96 = sphi 0, %s96
      %s98 = sphi 0, %s96
      %s99 = sphi 0, %s98
      %s113 = sphi 0, %s99
      %s117 = sphi 0, %s117
      %s119 = sphi 0, %s117
      %s120 = sphi 0, %s119
      %s134 = sphi 0, %s120
      %s140 = sphi 0, %s142
      %s143 = sphi 0, %s140
      %s144 = sphi 0, %s143
      %s160 = sphi 0, %s144
      %s166 = sphi 0, %s168
      %s169 = sphi 0, %s166
      %s170 = sphi 0, %s169
      %s186 = sphi 0, %s170
      %s192 = sphi 0, %s194
      %s195 = sphi 0, %s192
      %s196 = sphi 0, %s195
      %s212 = sphi 0, %s196
      %s218 = sphi 0, %s220
      %s221 = sphi 0, %s218
      %s222 = sphi 0, %s221
      %s238 = sphi 0, %s222
      %s242 = sphi 0, %s242
      %s244 = sphi 0, %s242
      %s245 = sphi 0, %s244
      %s259 = sphi 0, %s245
      %s263 = sphi 0, %s263
      %s265 = sphi 0, %s263
      %s266 = sphi 0, %s265
      %s280 = sphi 0, %s266
      %s284 = sphi 0, %s284
      %s286 = sphi 0, %s284
      %s287 = sphi 0, %s286
      %s301 = sphi 0, %s287
      %s305 = sphi 0, %s305
      %s307 = sphi 0, %s305
      %s308 = sphi 0, %s307
      %s322 = sphi 0, %s308
      %s326 = sphi 0, %s326
      %s328 = sphi 0, %s326
      %s329 = sphi 0, %s328
      %s343 = sphi 0, %s329
    $region4: #{tpu_custom_call.1} parent=1 // loop_header_branch
      %28 = sbr.rel (%p26) target = $region8
    $region5: #{tpu_custom_call.1} parent=1 // loop_body
      %s30 = ssub.s32 %s25, 1
      %s31 = ssub.s32 %s25, 2
      %s32 = sadd.s32 %s25, 1
      %s34 = sadd.s32 %s33, 1
      %p37 = scmp.eq.s32.totalorder %s25, 2
      %p38 = scmp.ne.s32.totalorder %s33, %s35
      %p39 = scmp.eq.s32.totalorder %s25, 0
      %p40 = por %p38, %p39
      %p41 = scmp.ne.s32.totalorder %s33, %s35
      %p42 = scmp.eq.s32.totalorder %s30, 2
      %p43 = por %p41, %p42
      %p44 = scmp.ne.s32.totalorder %s35, %s36
      %p45 = scmp.eq.s32.totalorder %s30, 0
      %p46 = por %p44, %p45
      %p47 = scmp.ne.s32.totalorder %s35, %s36
      %p48 = scmp.eq.s32.totalorder %s31, 2
      %p49 = por %p47, %p48
      %p51 = scmp.ne.s32.totalorder %s36, %s50
      %p52 = scmp.eq.s32.totalorder %s31, 0
      %p53 = por %p51, %p52
      %s55 = sadd.s32 %s54, 1
      %p58 = scmp.eq.s32.totalorder %s25, 2
      %p59 = scmp.ne.s32.totalorder %s54, %s56
      %p60 = scmp.eq.s32.totalorder %s25, 0
      %p61 = por %p59, %p60
      %p62 = scmp.ne.s32.totalorder %s54, %s56
      %p63 = scmp.eq.s32.totalorder %s30, 2
      %p64 = por %p62, %p63
      %p65 = scmp.ne.s32.totalorder %s56, %s57
      %p66 = scmp.eq.s32.totalorder %s30, 0
      %p67 = por %p65, %p66
      %p68 = scmp.ne.s32.totalorder %s56, %s57
      %p69 = scmp.eq.s32.totalorder %s31, 2
      %p70 = por %p68, %p69
      %p72 = scmp.ne.s32.totalorder %s57, %s71
      %p73 = scmp.eq.s32.totalorder %s31, 0
      %p74 = por %p72, %p73
      %s76 = sadd.s32 %s75, 1
      %p79 = scmp.eq.s32.totalorder %s25, 2
      %p80 = scmp.ne.s32.totalorder %s75, %s77
      %p81 = scmp.eq.s32.totalorder %s25, 0
      %p82 = por %p80, %p81
      %p83 = scmp.ne.s32.totalorder %s75, %s77
      %p84 = scmp.eq.s32.totalorder %s30, 2
      %p85 = por %p83, %p84
      %p86 = scmp.ne.s32.totalorder %s77, %s78
      %p87 = scmp.eq.s32.totalorder %s30, 0
      %p88 = por %p86, %p87
      %p89 = scmp.ne.s32.totalorder %s77, %s78
      %p90 = scmp.eq.s32.totalorder %s31, 2
      %p91 = por %p89, %p90
      %p93 = scmp.ne.s32.totalorder %s78, %s92
      %p94 = scmp.eq.s32.totalorder %s31, 0
      %p95 = por %p93, %p94
      %s97 = sadd.s32 %s96, 1
      %p100 = scmp.eq.s32.totalorder %s25, 2
      %p101 = scmp.ne.s32.totalorder %s96, %s98
      %p102 = scmp.eq.s32.totalorder %s25, 0
      %p103 = por %p101, %p102
      %p104 = scmp.ne.s32.totalorder %s96, %s98
      %p105 = scmp.eq.s32.totalorder %s30, 2
      %p106 = por %p104, %p105
      %p107 = scmp.ne.s32.totalorder %s98, %s99
      %p108 = scmp.eq.s32.totalorder %s30, 0
      %p109 = por %p107, %p108
      %p110 = scmp.ne.s32.totalorder %s98, %s99
      %p111 = scmp.eq.s32.totalorder %s31, 2
      %p112 = por %p110, %p111
      %p114 = scmp.ne.s32.totalorder %s99, %s113
      %p115 = scmp.eq.s32.totalorder %s31, 0
      %p116 = por %p114, %p115
      %s118 = sadd.s32 %s117, 1
      %p121 = scmp.eq.s32.totalorder %s25, 2
      %p122 = scmp.ne.s32.totalorder %s117, %s119
      %p123 = scmp.eq.s32.totalorder %s25, 0
      %p124 = por %p122, %p123
      %p125 = scmp.ne.s32.totalorder %s117, %s119
      %p126 = scmp.eq.s32.totalorder %s30, 2
      %p127 = por %p125, %p126
      %p128 = scmp.ne.s32.totalorder %s119, %s120
      %p129 = scmp.eq.s32.totalorder %s30, 0
      %p130 = por %p128, %p129
      %p131 = scmp.ne.s32.totalorder %s119, %s120
      %p132 = scmp.eq.s32.totalorder %s31, 2
      %p133 = por %p131, %p132
      %p135 = scmp.ne.s32.totalorder %s120, %s134
      %p136 = scmp.eq.s32.totalorder %s31, 0
      %p137 = por %p135, %p136
      %s138 = ssub.s32 %s25, %s32
      %p139 = scmp.eq.s32.totalorder %s138, 0
      %s141 = sadd.s32 %s140, 1
      %s142 = scalar_select %p139, %s140, %s141
      %p145 = pneg %p139
      %p146 = scmp.eq.s32.totalorder %s25, 2
      %p147 = por %p145, %p146
      %p148 = scmp.ne.s32.totalorder %s140, %s143
      %p149 = scmp.eq.s32.totalorder %s25, 0
      %p150 = por %p148, %p149
      %p151 = scmp.ne.s32.totalorder %s140, %s143
      %p152 = scmp.eq.s32.totalorder %s30, 2
      %p153 = por %p151, %p152
      %p154 = scmp.ne.s32.totalorder %s143, %s144
      %p155 = scmp.eq.s32.totalorder %s30, 0
      %p156 = por %p154, %p155
      %p157 = scmp.ne.s32.totalorder %s143, %s144
      %p158 = scmp.eq.s32.totalorder %s31, 2
      %p159 = por %p157, %p158
      %p161 = scmp.ne.s32.totalorder %s144, %s160
      %p162 = scmp.eq.s32.totalorder %s31, 0
      %p163 = por %p161, %p162
      %s164 = ssub.s32 %s25, %s32
      %p165 = scmp.eq.s32.totalorder %s164, 0
      %s167 = sadd.s32 %s166, 1
      %s168 = scalar_select %p165, %s166, %s167
      %p171 = pneg %p165
      %p172 = scmp.eq.s32.totalorder %s25, 2
      %p173 = por %p171, %p172
      %p174 = scmp.ne.s32.totalorder %s166, %s169
      %p175 = scmp.eq.s32.totalorder %s25, 0
      %p176 = por %p174, %p175
      %p177 = scmp.ne.s32.totalorder %s166, %s169
      %p178 = scmp.eq.s32.totalorder %s30, 2
      %p179 = por %p177, %p178
      %p180 = scmp.ne.s32.totalorder %s169, %s170
      %p181 = scmp.eq.s32.totalorder %s30, 0
      %p182 = por %p180, %p181
      %p183 = scmp.ne.s32.totalorder %s169, %s170
      %p184 = scmp.eq.s32.totalorder %s31, 2
      %p185 = por %p183, %p184
      %p187 = scmp.ne.s32.totalorder %s170, %s186
      %p188 = scmp.eq.s32.totalorder %s31, 0
      %p189 = por %p187, %p188
      %s190 = ssub.s32 %s25, %s32
      %p191 = scmp.eq.s32.totalorder %s190, 0
      %s193 = sadd.s32 %s192, 1
      %s194 = scalar_select %p191, %s192, %s193
      %p197 = pneg %p191
      %p198 = scmp.eq.s32.totalorder %s25, 2
      %p199 = por %p197, %p198
      %p200 = scmp.ne.s32.totalorder %s192, %s195
      %p201 = scmp.eq.s32.totalorder %s25, 0
      %p202 = por %p200, %p201
      %p203 = scmp.ne.s32.totalorder %s192, %s195
      %p204 = scmp.eq.s32.totalorder %s30, 2
      %p205 = por %p203, %p204
      %p206 = scmp.ne.s32.totalorder %s195, %s196
      %p207 = scmp.eq.s32.totalorder %s30, 0
      %p208 = por %p206, %p207
      %p209 = scmp.ne.s32.totalorder %s195, %s196
      %p210 = scmp.eq.s32.totalorder %s31, 2
      %p211 = por %p209, %p210
      %p213 = scmp.ne.s32.totalorder %s196, %s212
      %p214 = scmp.eq.s32.totalorder %s31, 0
      %p215 = por %p213, %p214
      %s216 = ssub.s32 %s25, %s32
      %p217 = scmp.eq.s32.totalorder %s216, 0
      %s219 = sadd.s32 %s218, 1
      %s220 = scalar_select %p217, %s218, %s219
      %p223 = pneg %p217
      %p224 = scmp.eq.s32.totalorder %s25, 2
      %p225 = por %p223, %p224
      %p226 = scmp.ne.s32.totalorder %s218, %s221
      %p227 = scmp.eq.s32.totalorder %s25, 0
      %p228 = por %p226, %p227
      %p229 = scmp.ne.s32.totalorder %s218, %s221
      %p230 = scmp.eq.s32.totalorder %s30, 2
      %p231 = por %p229, %p230
      %p232 = scmp.ne.s32.totalorder %s221, %s222
      %p233 = scmp.eq.s32.totalorder %s30, 0
      %p234 = por %p232, %p233
      %p235 = scmp.ne.s32.totalorder %s221, %s222
      %p236 = scmp.eq.s32.totalorder %s31, 2
      %p237 = por %p235, %p236
      %p239 = scmp.ne.s32.totalorder %s222, %s238
      %p240 = scmp.eq.s32.totalorder %s31, 0
      %p241 = por %p239, %p240
      %s243 = sadd.s32 %s242, 1
      %p246 = scmp.eq.s32.totalorder %s25, 2
      %p247 = scmp.ne.s32.totalorder %s242, %s244
      %p248 = scmp.eq.s32.totalorder %s25, 0
      %p249 = por %p247, %p248
      %p250 = scmp.ne.s32.totalorder %s242, %s244
      %p251 = scmp.eq.s32.totalorder %s30, 2
      %p252 = por %p250, %p251
      %p253 = scmp.ne.s32.totalorder %s244, %s245
      %p254 = scmp.eq.s32.totalorder %s30, 0
      %p255 = por %p253, %p254
      %p256 = scmp.ne.s32.totalorder %s244, %s245
      %p257 = scmp.eq.s32.totalorder %s31, 2
      %p258 = por %p256, %p257
      %p260 = scmp.ne.s32.totalorder %s245, %s259
      %p261 = scmp.eq.s32.totalorder %s31, 0
      %p262 = por %p260, %p261
      %s264 = sadd.s32 %s263, 1
      %p267 = scmp.eq.s32.totalorder %s25, 2
      %p268 = scmp.ne.s32.totalorder %s263, %s265
      %p269 = scmp.eq.s32.totalorder %s25, 0
      %p270 = por %p268, %p269
      %p271 = scmp.ne.s32.totalorder %s263, %s265
      %p272 = scmp.eq.s32.totalorder %s30, 2
      %p273 = por %p271, %p272
      %p274 = scmp.ne.s32.totalorder %s265, %s266
      %p275 = scmp.eq.s32.totalorder %s30, 0
      %p276 = por %p274, %p275
      %p277 = scmp.ne.s32.totalorder %s265, %s266
      %p278 = scmp.eq.s32.totalorder %s31, 2
      %p279 = por %p277, %p278
      %p281 = scmp.ne.s32.totalorder %s266, %s280
      %p282 = scmp.eq.s32.totalorder %s31, 0
      %p283 = por %p281, %p282
      %s285 = sadd.s32 %s284, 1
      %p288 = scmp.eq.s32.totalorder %s25, 2
      %p289 = scmp.ne.s32.totalorder %s284, %s286
      %p290 = scmp.eq.s32.totalorder %s25, 0
      %p291 = por %p289, %p290
      %p292 = scmp.ne.s32.totalorder %s284, %s286
      %p293 = scmp.eq.s32.totalorder %s30, 2
      %p294 = por %p292, %p293
      %p295 = scmp.ne.s32.totalorder %s286, %s287
      %p296 = scmp.eq.s32.totalorder %s30, 0
      %p297 = por %p295, %p296
      %p298 = scmp.ne.s32.totalorder %s286, %s287
      %p299 = scmp.eq.s32.totalorder %s31, 2
      %p300 = por %p298, %p299
      %p302 = scmp.ne.s32.totalorder %s287, %s301
      %p303 = scmp.eq.s32.totalorder %s31, 0
      %p304 = por %p302, %p303
      %s306 = sadd.s32 %s305, 1
      %p309 = scmp.eq.s32.totalorder %s25, 2
      %p310 = scmp.ne.s32.totalorder %s305, %s307
      %p311 = scmp.eq.s32.totalorder %s25, 0
      %p312 = por %p310, %p311
      %p313 = scmp.ne.s32.totalorder %s305, %s307
      %p314 = scmp.eq.s32.totalorder %s30, 2
      %p315 = por %p313, %p314
      %p316 = scmp.ne.s32.totalorder %s307, %s308
      %p317 = scmp.eq.s32.totalorder %s30, 0
      %p318 = por %p316, %p317
      %p319 = scmp.ne.s32.totalorder %s307, %s308
      %p320 = scmp.eq.s32.totalorder %s31, 2
      %p321 = por %p319, %p320
      %p323 = scmp.ne.s32.totalorder %s308, %s322
      %p324 = scmp.eq.s32.totalorder %s31, 0
      %p325 = por %p323, %p324
      %s327 = sadd.s32 %s326, 1
      %p330 = scmp.eq.s32.totalorder %s25, 2
      %p331 = scmp.ne.s32.totalorder %s326, %s328
      %p332 = scmp.eq.s32.totalorder %s25, 0
      %p333 = por %p331, %p332
      %p334 = scmp.ne.s32.totalorder %s326, %s328
      %p335 = scmp.eq.s32.totalorder %s30, 2
      %p336 = por %p334, %p335
      %p337 = scmp.ne.s32.totalorder %s328, %s329
      %p338 = scmp.eq.s32.totalorder %s30, 0
      %p339 = por %p337, %p338
      %p340 = scmp.ne.s32.totalorder %s328, %s329
      %p341 = scmp.eq.s32.totalorder %s31, 2
      %p342 = por %p340, %p341
      %p344 = scmp.ne.s32.totalorder %s329, %s343
      %p345 = scmp.eq.s32.totalorder %s31, 0
      %p346 = por %p344, %p345
      %p347 = scmp.le.s32.totalorder 1, %s25
      %p348 = scmp.lt.s32.totalorder %s25, 4
      %p349 = pnand %p347, %p348
      %p350 = pneg %p349
      // Predicated region
      $region9: #{tpu_custom_call.1} parent=5 // pred_check
        _
      $region10: #{tpu_custom_call.1} parent=5 // pred_check_branch
        %352 = sbr.rel (%p349) target = $region12
      $region11: #{tpu_custom_call.1} parent=5 // pred_region
        %s353 = ssub.s32 %s25, 1
        // Predicated region
        $region13: #{tpu_custom_call.1} parent=11 // pred_check
          %p354 = pneg %p46
        $region14: #{tpu_custom_call.1} parent=11 // pred_check_branch
          %356 = sbr.rel (%p354) target = $region16
        $region15: #{tpu_custom_call.1} parent=11 // pred_region
          _
        $region16: #{tpu_custom_call.1} parent=11 // pred_fallthru
          _
        // Predicated region
        $region17: #{tpu_custom_call.1} parent=11 // pred_check
          %p357 = pneg %p67
        $region18: #{tpu_custom_call.1} parent=11 // pred_check_branch
          %359 = sbr.rel (%p357) target = $region20
        $region19: #{tpu_custom_call.1} parent=11 // pred_region
          %s361 = ssub.s32 2048, 2048
          %362 = vsyncadd [#allocation5], %s361
          %s363 = sshll.u32 [#allocation4], 4
          %s364 = int_to_ptr.vmem [resolvable:$true] %s363
          %369 = dma.hbm_to_vmem [thread:$0]  %s1, 2048, %s364, [#allocation5], 256, 256, 16
        $region20: #{tpu_custom_call.1} parent=11 // pred_fallthru
          _
        // Predicated region
        $region21: #{tpu_custom_call.1} parent=11 // pred_check
          %p370 = pneg %p88
        $region22: #{tpu_custom_call.1} parent=11 // pred_check_branch
          %372 = sbr.rel (%p370) target = $region24
        $region23: #{tpu_custom_call.1} parent=11 // pred_region
          _
        $region24: #{tpu_custom_call.1} parent=11 // pred_fallthru
          _
        // Predicated region
        $region25: #{tpu_custom_call.1} parent=11 // pred_check
          %p373 = pneg %p109
        $region26: #{tpu_custom_call.1} parent=11 // pred_check_branch
          %375 = sbr.rel (%p373) target = $region28
        $region27: #{tpu_custom_call.1} parent=11 // pred_region
          _
        $region28: #{tpu_custom_call.1} parent=11 // pred_fallthru
          _
        // Predicated region
        $region29: #{tpu_custom_call.1} parent=11 // pred_check
          %p376 = pneg %p130
        $region30: #{tpu_custom_call.1} parent=11 // pred_check_branch
          %378 = sbr.rel (%p376) target = $region32
        $region31: #{tpu_custom_call.1} parent=11 // pred_region
          _
        $region32: #{tpu_custom_call.1} parent=11 // pred_fallthru
          _
        // Predicated region
        $region33: #{tpu_custom_call.1} parent=11 // pred_check
          %p379 = pneg %p255
        $region34: #{tpu_custom_call.1} parent=11 // pred_check_branch
          %381 = sbr.rel (%p379) target = $region36
        $region35: #{tpu_custom_call.1} parent=11 // pred_region
          _
        $region36: #{tpu_custom_call.1} parent=11 // pred_fallthru
          _
        // Predicated region
        $region37: #{tpu_custom_call.1} parent=11 // pred_check
          %p382 = pneg %p276
        $region38: #{tpu_custom_call.1} parent=11 // pred_check_branch
          %384 = sbr.rel (%p382) target = $region40
        $region39: #{tpu_custom_call.1} parent=11 // pred_region
          _
        $region40: #{tpu_custom_call.1} parent=11 // pred_fallthru
          _
        // Predicated region
        $region41: #{tpu_custom_call.1} parent=11 // pred_check
          %p385 = pneg %p297
        $region42: #{tpu_custom_call.1} parent=11 // pred_check_branch
          %387 = sbr.rel (%p385) target = $region44
        $region43: #{tpu_custom_call.1} parent=11 // pred_region
          _
        $region44: #{tpu_custom_call.1} parent=11 // pred_fallthru
          _
        // Predicated region
        $region45: #{tpu_custom_call.1} parent=11 // pred_check
          %p388 = pneg %p318
        $region46: #{tpu_custom_call.1} parent=11 // pred_check_branch
          %390 = sbr.rel (%p388) target = $region48
        $region47: #{tpu_custom_call.1} parent=11 // pred_region
          _
        $region48: #{tpu_custom_call.1} parent=11 // pred_fallthru
          _
      $region12: #{tpu_custom_call.1} parent=5 // pred_fallthru
        _
      %p391 = scmp.lt.s32.totalorder %s25, 3
      // Predicated region
      $region49: #{tpu_custom_call.1} parent=5 // pred_check
        %p392 = pneg %p391
      $region50: #{tpu_custom_call.1} parent=5 // pred_check_branch
        %394 = sbr.rel (%p392) target = $region52
      $region51: #{tpu_custom_call.1} parent=5 // pred_region
        // Predicated region
        $region53: #{tpu_custom_call.1} parent=51 // pred_check
          %p395 = pneg %p150
        $region54: #{tpu_custom_call.1} parent=51 // pred_check_branch
          %397 = sbr.rel (%p395) target = $region56
        $region55: #{tpu_custom_call.1} parent=51 // pred_region
          %p398 = scmp.lt.s32.totalorder %s25, 2
          %s399 = scalar_select %p398, %s25, 2
          %s400 = smul.addr %s399, 16
          %s401 = smul.addr %s400, 4
          %s402 = scalar_lea.vmem %s5, %s401
        $region56: #{tpu_custom_call.1} parent=51 // pred_fallthru
          _
        // Predicated region
        $region57: #{tpu_custom_call.1} parent=51 // pred_check
          %p403 = pneg %p176
        $region58: #{tpu_custom_call.1} parent=51 // pred_check_branch
          %405 = sbr.rel (%p403) target = $region60
        $region59: #{tpu_custom_call.1} parent=51 // pred_region
          %p406 = scmp.lt.s32.totalorder %s25, 2
          %s407 = scalar_select %p406, %s25, 2
          %s408 = scalar_lea.vmem %s6, %s407
        $region60: #{tpu_custom_call.1} parent=51 // pred_fallthru
          _
        // Predicated region
        $region61: #{tpu_custom_call.1} parent=51 // pred_check
          %p409 = pneg %p202
        $region62: #{tpu_custom_call.1} parent=51 // pred_check_branch
          %411 = sbr.rel (%p409) target = $region64
        $region63: #{tpu_custom_call.1} parent=51 // pred_region
          %s412 = sand.u32 %s192, 1
          %s413 = scalar_lea.sflag [#allocation7], %s412
          %s414 = sand.u32 %s192, 1
          %s415 = smul.addr %s414, 64
          %s416 = scalar_lea.vmem [#allocation6], %s415
          %s418 = ssub.s32 1024, 1024
          %419 = vsyncadd %s413, %s418
          %s420 = smul.addr %s25, 16
          %s421 = smul.addr %s420, 64
          %s422 = scalar_lea.hbm %s7, %s421
          %s423 = sshll.u32 %s416, 4
          %s424 = int_to_ptr.vmem [resolvable:$true] %s423
          %429 = dma.hbm_to_vmem [thread:$0]  %s422, 1024, %s424, %s413, 64, 64, 4
        $region64: #{tpu_custom_call.1} parent=51 // pred_fallthru
          _
        // Predicated region
        $region65: #{tpu_custom_call.1} parent=51 // pred_check
          %p430 = pneg %p228
        $region66: #{tpu_custom_call.1} parent=51 // pred_check_branch
          %432 = sbr.rel (%p430) target = $region68
        $region67: #{tpu_custom_call.1} parent=51 // pred_region
          %p433 = scmp.lt.s32.totalorder %s25, 2
          %s434 = scalar_select %p433, %s25, 2
          %s435 = scalar_lea.vmem %s8, %s434
        $region68: #{tpu_custom_call.1} parent=51 // pred_fallthru
          _
      $region52: #{tpu_custom_call.1} parent=5 // pred_fallthru
        _
      %p436 = scmp.le.s32.totalorder 1, %s25
      %p437 = scmp.lt.s32.totalorder %s25, 4
      %p438 = pnand %p436, %p437
      %p439 = pneg %p438
      // Predicated region
      $region69: #{tpu_custom_call.1} parent=5 // pred_check
        _
      $region70: #{tpu_custom_call.1} parent=5 // pred_check_branch
        %441 = sbr.rel (%p438) target = $region72
      $region71: #{tpu_custom_call.1} parent=5 // pred_region
        %s442 = ssub.s32 %s25, 1
        // Predicated region
        $region73: #{tpu_custom_call.1} parent=71 // pred_check
          %p443 = pneg %p67
        $region74: #{tpu_custom_call.1} parent=71 // pred_check_branch
          %445 = sbr.rel (%p443) target = $region76
        $region75: #{tpu_custom_call.1} parent=71 // pred_region
          %446 = dma.done [#allocation5], 2048
        $region76: #{tpu_custom_call.1} parent=71 // pred_fallthru
          _
        %s447 = sand.u32 %s195, 1
        %s448 = scalar_lea.sflag [#allocation7], %s447
        %s449 = sand.u32 %s195, 1
        %s450 = smul.addr %s449, 64
        %s451 = scalar_lea.vmem [#allocation6], %s450
        // Predicated region
        $region77: #{tpu_custom_call.1} parent=71 // pred_check
          %p452 = pneg %p208
        $region78: #{tpu_custom_call.1} parent=71 // pred_check_branch
          %454 = sbr.rel (%p452) target = $region80
        $region79: #{tpu_custom_call.1} parent=71 // pred_region
          %455 = dma.done %s448, 1024
        $region80: #{tpu_custom_call.1} parent=71 // pred_fallthru
          _
        %p456 = pneg %p46
        %p457 = pneg %p43
        %p458 = pneg %p67
        %p459 = pneg %p64
        %p460 = pneg %p88
        %p461 = pneg %p85
        %p462 = pneg %p109
        %p463 = pneg %p106
        %p464 = pneg %p130
        %p465 = pneg %p127
        %p466 = scmp.lt.s32.totalorder %s30, 2
        %s467 = scalar_select %p466, %s30, 2
        %s468 = smul.addr %s467, 16
        %s469 = smul.addr %s468, 4
        %s470 = scalar_lea.vmem %s5, %s469
        %p471 = pneg %p156
        %p472 = pneg %p153
        %p473 = scmp.lt.s32.totalorder %s30, 2
        %s474 = scalar_select %p473, %s30, 2
        %s475 = scalar_lea.vmem %s6, %s474
        %p476 = pneg %p182
        %p477 = pneg %p179
        %s478 = sand.u32 %s195, 1
        %s479 = scalar_lea.sflag [#allocation7], %s478
        %s480 = sand.u32 %s195, 1
        %s481 = smul.addr %s480, 64
        %s482 = scalar_lea.vmem [#allocation6], %s481
        %p483 = pneg %p208
        %p484 = pneg %p205
        %p485 = scmp.lt.s32.totalorder %s30, 2
        %s486 = scalar_select %p485, %s30, 2
        %s487 = scalar_lea.vmem %s8, %s486
        %p488 = pneg %p234
        %p489 = pneg %p231
        %p490 = pneg %p255
        %p491 = pneg %p252
        %p492 = pneg %p276
        %p493 = pneg %p273
        %p494 = pneg %p297
        %p495 = pneg %p294
        %p496 = pneg %p318
        %p497 = pneg %p315
        %p498 = pneg %p339
        %p499 = pneg %p336
        %p500 = scmp.lt.s32.totalorder %s30, 2
        %s501 = scalar_select %p500, %s30, 2
        %s502 = smul.addr %s501, 16
        %s503 = smul.addr %s502, 4
        %s504 = scalar_lea.vmem %s5, %s503
        %p505 = scmp.lt.s32.totalorder %s30, 2
        %s506 = scalar_select %p505, %s30, 2
        %s507 = scalar_lea.vmem %s6, %s506
        %p508 = scmp.lt.s32.totalorder %s30, 2
        %s509 = scalar_select %p508, %s30, 2
        %s510 = scalar_lea.vmem %s8, %s509
        %p512 = scmp.eq.s32.totalorder %s30, 0
        // Predicated region
        $region81: #{tpu_custom_call.1} parent=71 // pred_check
          %p513 = pneg %p512
        $region82: #{tpu_custom_call.1} parent=71 // pred_check_branch
          %515 = sbr.rel (%p513) target = $region84
        $region83: #{tpu_custom_call.1} parent=71 // pred_region
          %v516 = vld [vmem:[%s0] sm:$0xf]
          %v517 = vld [vmem:[%s0 + $0x4] sm:$0xf]
          %v518 = vld [vmem:[%s0 + $0x8] sm:$0xf]
          %v519 = vld [vmem:[%s0 + $0xc] sm:$0xf]
          %v520 = vld [vmem:[%s0 + $0x10] sm:$0xf]
          %v521 = vld [vmem:[%s0 + $0x14] sm:$0xf]
          %v522 = vld [vmem:[%s0 + $0x18] sm:$0xf]
          %v523 = vld [vmem:[%s0 + $0x1c] sm:$0xf]
          %v524 = vld [vmem:[%s0 + $0x20] sm:$0xf]
          %v525 = vld [vmem:[%s0 + $0x24] sm:$0xf]
          %v526 = vld [vmem:[%s0 + $0x28] sm:$0xf]
          %v527 = vld [vmem:[%s0 + $0x2c] sm:$0xf]
          %v528 = vld [vmem:[%s0 + $0x30] sm:$0xf]
          %v529 = vld [vmem:[%s0 + $0x34] sm:$0xf]
          %v530 = vld [vmem:[%s0 + $0x38] sm:$0xf]
          %v531 = vld [vmem:[%s0 + $0x3c] sm:$0xf]
          %v532 = vld [vmem:[%s0 + $0x40] sm:$0xf]
          %v533 = vld [vmem:[%s0 + $0x44] sm:$0xf]
          %v534 = vld [vmem:[%s0 + $0x48] sm:$0xf]
          %v535 = vld [vmem:[%s0 + $0x4c] sm:$0xf]
          %v536 = vld [vmem:[%s0 + $0x50] sm:$0xf]
          %v537 = vld [vmem:[%s0 + $0x54] sm:$0xf]
          %v538 = vld [vmem:[%s0 + $0x58] sm:$0xf]
          %v539 = vld [vmem:[%s0 + $0x5c] sm:$0xf]
          %v540 = vld [vmem:[%s0 + $0x60] sm:$0xf]
          %v541 = vld [vmem:[%s0 + $0x64] sm:$0xf]
          %v542 = vld [vmem:[%s0 + $0x68] sm:$0xf]
          %v543 = vld [vmem:[%s0 + $0x6c] sm:$0xf]
          %v544 = vld [vmem:[%s0 + $0x70] sm:$0xf]
          %v545 = vld [vmem:[%s0 + $0x74] sm:$0xf]
          %v546 = vld [vmem:[%s0 + $0x78] sm:$0xf]
          %v547 = vld [vmem:[%s0 + $0x7c] sm:$0xf]
          %v548 = vld [vmem:[%s3] sm:$0xf]
          %v549 = vld [vmem:[%s3 + $0x4] sm:$0xf]
          %v550 = vld [vmem:[%s4] sm:$0x1]
          %v552 = vlaneseq
          %v553 = vshrl.u32 %v552, 7
          %v554 = vsub.s32 0, %v553
          %v555 = vrot.slane %v550, %v554
          %v589 = vunpack.c.l.b16 %v516
          %v590 = vunpack.c.l.b16 %v517
          %v591 = vunpack.c.l.b16 %v518
          %v592 = vunpack.c.l.b16 %v519
          %v593 = vunpack.c.l.b16 %v520
          %v594 = vunpack.c.l.b16 %v521
          %v595 = vunpack.c.l.b16 %v522
          %v596 = vunpack.c.l.b16 %v523
          %v597 = vunpack.c.l.b16 %v524
          %v598 = vunpack.c.l.b16 %v525
          %v599 = vunpack.c.l.b16 %v526
          %v600 = vunpack.c.l.b16 %v527
          %v601 = vunpack.c.l.b16 %v528
          %v602 = vunpack.c.l.b16 %v529
          %v603 = vunpack.c.l.b16 %v530
          %v604 = vunpack.c.l.b16 %v531
          %v605 = vunpack.c.l.b16 %v532
          %v606 = vunpack.c.l.b16 %v533
          %v607 = vunpack.c.l.b16 %v534
          %v608 = vunpack.c.l.b16 %v535
          %v609 = vunpack.c.l.b16 %v536
          %v610 = vunpack.c.l.b16 %v537
          %v611 = vunpack.c.l.b16 %v538
          %v612 = vunpack.c.l.b16 %v539
          %v613 = vunpack.c.l.b16 %v540
          %v614 = vunpack.c.l.b16 %v541
          %v615 = vunpack.c.l.b16 %v542
          %v616 = vunpack.c.l.b16 %v543
          %v617 = vunpack.c.l.b16 %v544
          %v618 = vunpack.c.l.b16 %v545
          %v619 = vunpack.c.l.b16 %v546
          %v620 = vunpack.c.l.b16 %v547
          %v621 = vpack.c.b16 %v590, %v589
          %v622 = vpack.c.b16 %v592, %v591
          %v623 = vpack.c.b16 %v594, %v593
          %v624 = vpack.c.b16 %v596, %v595
          %v625 = vpack.c.b16 %v598, %v597
          %v626 = vpack.c.b16 %v600, %v599
          %v627 = vpack.c.b16 %v602, %v601
          %v628 = vpack.c.b16 %v604, %v603
          %v629 = vpack.c.b16 %v606, %v605
          %v630 = vpack.c.b16 %v608, %v607
          %v631 = vpack.c.b16 %v610, %v609
          %v632 = vpack.c.b16 %v612, %v611
          %v633 = vpack.c.b16 %v614, %v613
          %v634 = vpack.c.b16 %v616, %v615
          %v635 = vpack.c.b16 %v618, %v617
          %v636 = vpack.c.b16 %v620, %v619
          %v639 = vunpack.c.l.b16 %v548
          %v640 = vunpack.c.l.b16 %v549
          %v641 = vpack.c.b16 %v640, %v639
          %vm643 = vcmask 130048
          %v645 = vsel %vm643, %v621, 0
          %v648 = vsel %vm643, %v622, 0
          %v651 = vsel %vm643, %v623, 0
          %v654 = vsel %vm643, %v624, 0
          %v657 = vsel %vm643, %v625, 0
          %v660 = vsel %vm643, %v626, 0
          %v663 = vsel %vm643, %v627, 0
          %v666 = vsel %vm643, %v628, 0
          %v669 = vsel %vm643, %v629, 0
          %v672 = vsel %vm643, %v630, 0
          %v675 = vsel %vm643, %v631, 0
          %v678 = vsel %vm643, %v632, 0
          %v681 = vsel %vm643, %v633, 0
          %v684 = vsel %vm643, %v634, 0
          %v687 = vsel %vm643, %v635, 0
          %v690 = vsel %vm643, %v636, 0
          %692 = vmatprep.subr.bf16.mxu0 0
          %693 = vmatpush1.bf16.msra.mxu0 %v641
          %694 = vmatprep.subr.bf16.mxu0 0
          %695 = vmatpush1.bf16.msra.mxu0 0
          %696 = vmatprep.subr.bf16.mxu0 0
          %697 = vmatpush1.bf16.msra.mxu0 0
          %698 = vmatprep.subr.bf16.mxu0 0
          %699 = vmatpush1.bf16.msra.mxu0 0
          %700 = vmatprep.subr.bf16.mxu0 0
          %701 = vmatpush1.bf16.msra.mxu0 0
          %702 = vmatprep.subr.bf16.mxu0 0
          %703 = vmatpush1.bf16.msra.mxu0 0
          %704 = vmatprep.subr.bf16.mxu0 0
          %705 = vmatpush1.bf16.msra.mxu0 0
          %706 = vmatprep.subr.bf16.mxu0 0
          %707 = vmatpush1.bf16.msra.mxu0 0
          %708 = vmatprep.subr.bf16.mxu0 0
          %709 = vmatpush1.bf16.msra.mxu0 0
          %710 = vmatprep.subr.bf16.mxu0 0
          %711 = vmatpush1.bf16.msra.mxu0 0
          %712 = vmatprep.subr.bf16.mxu0 0
          %713 = vmatpush1.bf16.msra.mxu0 0
          %714 = vmatprep.subr.bf16.mxu0 0
          %715 = vmatpush1.bf16.msra.mxu0 0
          %716 = vmatprep.subr.bf16.mxu0 0
          %717 = vmatpush1.bf16.msra.mxu0 0
          %718 = vmatprep.subr.bf16.mxu0 0
          %719 = vmatpush1.bf16.msra.mxu0 0
          %720 = vmatprep.subr.bf16.mxu0 0
          %721 = vmatpush1.bf16.msra.mxu0 0
          %722 = vmatprep.subr.bf16.mxu0 0
          %723 = vmatpush1.bf16.msra.mxu0 0
          %724 = vmatprep.mubr.bf16.mxu0 0
          %725 = vmatmul.mubr.bf16.gmra.mrb[0].mxu0 %v645
          %v726 = vpop.f32.mrb[0].mxu0
          %v727 = vadd.f32 %v555, %v726
          %v728 = vpop.f32.mrb[0].mxu0
          %v729 = vpop.f32.mrb[0].mxu0
          %v730 = vadd.f32 %v555, %v729
          %v731 = vpop.f32.mrb[0].mxu0
          %732 = vmatprep.mubr.bf16.mxu0 0
          %733 = vmatmul.mubr.bf16.gmra.mrb[0].mxu0 %v648
          %v734 = vpop.f32.mrb[0].mxu0
          %v735 = vadd.f32 %v555, %v734
          %v736 = vpop.f32.mrb[0].mxu0
          %v737 = vpop.f32.mrb[0].mxu0
          %v738 = vadd.f32 %v555, %v737
          %v739 = vpop.f32.mrb[0].mxu0
          %740 = vmatprep.mubr.bf16.mxu0 0
          %741 = vmatmul.mubr.bf16.gmra.mrb[0].mxu0 %v651
          %v742 = vpop.f32.mrb[0].mxu0
          %v743 = vadd.f32 %v555, %v742
          %v744 = vpop.f32.mrb[0].mxu0
          %v745 = vpop.f32.mrb[0].mxu0
          %v746 = vadd.f32 %v555, %v745
          %v747 = vpop.f32.mrb[0].mxu0
          %748 = vmatprep.mubr.bf16.mxu0 0
          %749 = vmatmul.mubr.bf16.gmra.mrb[0].mxu0 %v654
          %v750 = vpop.f32.mrb[0].mxu0
          %v751 = vadd.f32 %v555, %v750
          %v752 = vpop.f32.mrb[0].mxu0
          %v753 = vpop.f32.mrb[0].mxu0
          %v754 = vadd.f32 %v555, %v753
          %v755 = vpop.f32.mrb[0].mxu0
          %756 = vmatprep.mubr.bf16.mxu0 0
          %757 = vmatmul.mubr.bf16.gmra.mrb[0].mxu0 %v657
          %v758 = vpop.f32.mrb[0].mxu0
          %v759 = vadd.f32 %v555, %v758
          %v760 = vpop.f32.mrb[0].mxu0
          %v761 = vpop.f32.mrb[0].mxu0
          %v762 = vadd.f32 %v555, %v761
          %v763 = vpop.f32.mrb[0].mxu0
          %764 = vmatprep.mubr.bf16.mxu0 0
          %765 = vmatmul.mubr.bf16.gmra.mrb[0].mxu0 %v660
          %v766 = vpop.f32.mrb[0].mxu0
          %v767 = vadd.f32 %v555, %v766
          %v768 = vpop.f32.mrb[0].mxu0
          %v769 = vpop.f32.mrb[0].mxu0
          %v770 = vadd.f32 %v555, %v769
          %v771 = vpop.f32.mrb[0].mxu0
          %772 = vmatprep.mubr.bf16.mxu0 0
          %773 = vmatmul.mubr.bf16.gmra.mrb[0].mxu0 %v663
          %v774 = vpop.f32.mrb[0].mxu0
          %v775 = vadd.f32 %v555, %v774
          %v776 = vpop.f32.mrb[0].mxu0
          %v777 = vpop.f32.mrb[0].mxu0
          %v778 = vadd.f32 %v555, %v777
          %v779 = vpop.f32.mrb[0].mxu0
          %780 = vmatprep.mubr.bf16.mxu0 0
          %781 = vmatmul.mubr.bf16.gmra.mrb[0].mxu0 %v666
          %v782 = vpop.f32.mrb[0].mxu0
          %v783 = vadd.f32 %v555, %v782
          %v784 = vpop.f32.mrb[0].mxu0
          %v785 = vpop.f32.mrb[0].mxu0
          %v786 = vadd.f32 %v555, %v785
          %v787 = vpop.f32.mrb[0].mxu0
          %788 = vmatprep.mubr.bf16.mxu0 0
          %789 = vmatmul.mubr.bf16.gmra.mrb[0].mxu0 %v669
          %v790 = vpop.f32.mrb[0].mxu0
          %v791 = vadd.f32 %v555, %v790
          %v792 = vpop.f32.mrb[0].mxu0
          %v793 = vpop.f32.mrb[0].mxu0
          %v794 = vadd.f32 %v555, %v793
          %v795 = vpop.f32.mrb[0].mxu0
          %796 = vmatprep.mubr.bf16.mxu0 0
          %797 = vmatmul.mubr.bf16.gmra.mrb[0].mxu0 %v672
          %v798 = vpop.f32.mrb[0].mxu0
          %v799 = vadd.f32 %v555, %v798
          %v800 = vpop.f32.mrb[0].mxu0
          %v801 = vpop.f32.mrb[0].mxu0
          %v802 = vadd.f32 %v555, %v801
          %v803 = vpop.f32.mrb[0].mxu0
          %804 = vmatprep.mubr.bf16.mxu0 0
          %805 = vmatmul.mubr.bf16.gmra.mrb[0].mxu0 %v675
          %v806 = vpop.f32.mrb[0].mxu0
          %v807 = vadd.f32 %v555, %v806
          %v808 = vpop.f32.mrb[0].mxu0
          %v809 = vpop.f32.mrb[0].mxu0
          %v810 = vadd.f32 %v555, %v809
          %v811 = vpop.f32.mrb[0].mxu0
          %812 = vmatprep.mubr.bf16.mxu0 0
          %813 = vmatmul.mubr.bf16.gmra.mrb[0].mxu0 %v678
          %v814 = vpop.f32.mrb[0].mxu0
          %v815 = vadd.f32 %v555, %v814
          %v816 = vpop.f32.mrb[0].mxu0
          %v817 = vpop.f32.mrb[0].mxu0
          %v818 = vadd.f32 %v555, %v817
          %v819 = vpop.f32.mrb[0].mxu0
          %820 = vmatprep.mubr.bf16.mxu0 0
          %821 = vmatmul.mubr.bf16.gmra.mrb[0].mxu0 %v681
          %v822 = vpop.f32.mrb[0].mxu0
          %v823 = vadd.f32 %v555, %v822
          %v824 = vpop.f32.mrb[0].mxu0
          %v825 = vpop.f32.mrb[0].mxu0
          %v826 = vadd.f32 %v555, %v825
          %v827 = vpop.f32.mrb[0].mxu0
          %828 = vmatprep.mubr.bf16.mxu0 0
          %829 = vmatmul.mubr.bf16.gmra.mrb[0].mxu0 %v684
          %v830 = vpop.f32.mrb[0].mxu0
          %v831 = vadd.f32 %v555, %v830
          %v832 = vpop.f32.mrb[0].mxu0
          %v833 = vpop.f32.mrb[0].mxu0
          %v834 = vadd.f32 %v555, %v833
          %v835 = vpop.f32.mrb[0].mxu0
          %836 = vmatprep.mubr.bf16.mxu0 0
          %837 = vmatmul.mubr.bf16.gmra.mrb[0].mxu0 %v687
          %v838 = vpop.f32.mrb[0].mxu0
          %v839 = vadd.f32 %v555, %v838
          %v840 = vpop.f32.mrb[0].mxu0
          %v841 = vpop.f32.mrb[0].mxu0
          %v842 = vadd.f32 %v555, %v841
          %v843 = vpop.f32.mrb[0].mxu0
          %844 = vmatprep.mubr.bf16.mxu0 0
          %845 = vmatmul.mubr.bf16.gmra.mrb[0].mxu0 %v690
          %v846 = vpop.f32.mrb[0].mxu0
          %v847 = vadd.f32 %v555, %v846
          %v848 = vpop.f32.mrb[0].mxu0
          %v849 = vpop.f32.mrb[0].mxu0
          %v850 = vadd.f32 %v555, %v849
          %v851 = vpop.f32.mrb[0].mxu0
          %852 = vdwg.mxu0
          %853 = vst [vmem:[#allocation2] sm:$0xff] %v727
          %854 = vst [vmem:[#allocation2 + $0x8] sm:$0xff] %v730
          %855 = vst [vmem:[#allocation2 + $0x10] sm:$0xff] %v735
          %856 = vst [vmem:[#allocation2 + $0x18] sm:$0xff] %v738
          %857 = vst [vmem:[#allocation2 + $0x20] sm:$0xff] %v743
          %858 = vst [vmem:[#allocation2 + $0x28] sm:$0xff] %v746
          %859 = vst [vmem:[#allocation2 + $0x30] sm:$0xff] %v751
          %860 = vst [vmem:[#allocation2 + $0x38] sm:$0xff] %v754
          %861 = vst [vmem:[#allocation2 + $0x40] sm:$0xff] %v759
          %862 = vst [vmem:[#allocation2 + $0x48] sm:$0xff] %v762
          %863 = vst [vmem:[#allocation2 + $0x50] sm:$0xff] %v767
          %864 = vst [vmem:[#allocation2 + $0x58] sm:$0xff] %v770
          %865 = vst [vmem:[#allocation2 + $0x60] sm:$0xff] %v775
          %866 = vst [vmem:[#allocation2 + $0x68] sm:$0xff] %v778
          %867 = vst [vmem:[#allocation2 + $0x70] sm:$0xff] %v783
          %868 = vst [vmem:[#allocation2 + $0x78] sm:$0xff] %v786
          %869 = vst [vmem:[#allocation2 + $0x80] sm:$0xff] %v791
          %870 = vst [vmem:[#allocation2 + $0x88] sm:$0xff] %v794
          %871 = vst [vmem:[#allocation2 + $0x90] sm:$0xff] %v799
          %872 = vst [vmem:[#allocation2 + $0x98] sm:$0xff] %v802
          %873 = vst [vmem:[#allocation2 + $0xa0] sm:$0xff] %v807
          %874 = vst [vmem:[#allocation2 + $0xa8] sm:$0xff] %v810
          %875 = vst [vmem:[#allocation2 + $0xb0] sm:$0xff] %v815
          %876 = vst [vmem:[#allocation2 + $0xb8] sm:$0xff] %v818
          %877 = vst [vmem:[#allocation2 + $0xc0] sm:$0xff] %v823
          %878 = vst [vmem:[#allocation2 + $0xc8] sm:$0xff] %v826
          %879 = vst [vmem:[#allocation2 + $0xd0] sm:$0xff] %v831
          %880 = vst [vmem:[#allocation2 + $0xd8] sm:$0xff] %v834
          %881 = vst [vmem:[#allocation2 + $0xe0] sm:$0xff] %v839
          %882 = vst [vmem:[#allocation2 + $0xe8] sm:$0xff] %v842
          %883 = vst [vmem:[#allocation2 + $0xf0] sm:$0xff] %v847
          %884 = vst [vmem:[#allocation2 + $0xf8] sm:$0xff] %v850
        $region84: #{tpu_custom_call.1} parent=71 // pred_fallthru
          _
        %v885 = vld [vmem:[#allocation2] sm:$0xff]
        %v886 = vld [vmem:[#allocation2 + $0x8] sm:$0xff]
        %v887 = vld [vmem:[#allocation2 + $0x10] sm:$0xff]
        %v888 = vld [vmem:[#allocation2 + $0x18] sm:$0xff]
        %v889 = vld [vmem:[#allocation2 + $0x20] sm:$0xff]
        %v890 = vld [vmem:[#allocation2 + $0x28] sm:$0xff]
        %v891 = vld [vmem:[#allocation2 + $0x30] sm:$0xff]
        %v892 = vld [vmem:[#allocation2 + $0x38] sm:$0xff]
        %v893 = vld [vmem:[#allocation2 + $0x40] sm:$0xff]
        %v894 = vld [vmem:[#allocation2 + $0x48] sm:$0xff]
        %v895 = vld [vmem:[#allocation2 + $0x50] sm:$0xff]
        %v896 = vld [vmem:[#allocation2 + $0x58] sm:$0xff]
        %v897 = vld [vmem:[#allocation2 + $0x60] sm:$0xff]
        %v898 = vld [vmem:[#allocation2 + $0x68] sm:$0xff]
        %v899 = vld [vmem:[#allocation2 + $0x70] sm:$0xff]
        %v900 = vld [vmem:[#allocation2 + $0x78] sm:$0xff]
        %v901 = vld [vmem:[#allocation2 + $0x80] sm:$0xff]
        %v902 = vld [vmem:[#allocation2 + $0x88] sm:$0xff]
        %v903 = vld [vmem:[#allocation2 + $0x90] sm:$0xff]
        %v904 = vld [vmem:[#allocation2 + $0x98] sm:$0xff]
        %v905 = vld [vmem:[#allocation2 + $0xa0] sm:$0xff]
        %v906 = vld [vmem:[#allocation2 + $0xa8] sm:$0xff]
        %v907 = vld [vmem:[#allocation2 + $0xb0] sm:$0xff]
        %v908 = vld [vmem:[#allocation2 + $0xb8] sm:$0xff]
        %v909 = vld [vmem:[#allocation2 + $0xc0] sm:$0xff]
        %v910 = vld [vmem:[#allocation2 + $0xc8] sm:$0xff]
        %v911 = vld [vmem:[#allocation2 + $0xd0] sm:$0xff]
        %v912 = vld [vmem:[#allocation2 + $0xd8] sm:$0xff]
        %v913 = vld [vmem:[#allocation2 + $0xe0] sm:$0xff]
        %v914 = vld [vmem:[#allocation2 + $0xe8] sm:$0xff]
        %v915 = vld [vmem:[#allocation2 + $0xf0] sm:$0xff]
        %v916 = vld [vmem:[#allocation2 + $0xf8] sm:$0xff]
        %v917 = vpack.c.bf16 %v886, %v885
        %v918 = vpack.c.bf16 %v888, %v887
        %v919 = vpack.c.bf16 %v890, %v889
        %v920 = vpack.c.bf16 %v892, %v891
        %v921 = vpack.c.bf16 %v894, %v893
        %v922 = vpack.c.bf16 %v896, %v895
        %v923 = vpack.c.bf16 %v898, %v897
        %v924 = vpack.c.bf16 %v900, %v899
        %v925 = vpack.c.bf16 %v902, %v901
        %v926 = vpack.c.bf16 %v904, %v903
        %v927 = vpack.c.bf16 %v906, %v905
        %v928 = vpack.c.bf16 %v908, %v907
        %v929 = vpack.c.bf16 %v910, %v909
        %v930 = vpack.c.bf16 %v912, %v911
        %v931 = vpack.c.bf16 %v914, %v913
        %v932 = vpack.c.bf16 %v916, %v915
        %v933 = vld [vmem:[#allocation4] sm:$0xff]
        %v934 = vld [vmem:[#allocation4 + $0x8] sm:$0xff]
        %v935 = vld [vmem:[#allocation4 + $0x10] sm:$0xff]
        %v936 = vld [vmem:[#allocation4 + $0x18] sm:$0xff]
        %v937 = vld [vmem:[#allocation4 + $0x20] sm:$0xff]
        %v938 = vld [vmem:[#allocation4 + $0x28] sm:$0xff]
        %v939 = vld [vmem:[#allocation4 + $0x30] sm:$0xff]
        %v940 = vld [vmem:[#allocation4 + $0x38] sm:$0xff]
        %v941 = vld [vmem:[#allocation4 + $0x40] sm:$0xff]
        %v942 = vld [vmem:[#allocation4 + $0x48] sm:$0xff]
        %v943 = vld [vmem:[#allocation4 + $0x50] sm:$0xff]
        %v944 = vld [vmem:[#allocation4 + $0x58] sm:$0xff]
        %v945 = vld [vmem:[#allocation4 + $0x60] sm:$0xff]
        %v946 = vld [vmem:[#allocation4 + $0x68] sm:$0xff]
        %v947 = vld [vmem:[#allocation4 + $0x70] sm:$0xff]
        %v948 = vld [vmem:[#allocation4 + $0x78] sm:$0xff]
        %v949 = vunpack.c.l.s8.bf16 %v933
        %v950 = vunpack.c.l.s8.bf16 %v934
        %v951 = vunpack.c.h.s8.bf16 %v933
        %v952 = vunpack.c.h.s8.bf16 %v934
        %v953 = vunpack.c.l.s8.bf16 %v935
        %v954 = vunpack.c.l.s8.bf16 %v936
        %v955 = vunpack.c.h.s8.bf16 %v935
        %v956 = vunpack.c.h.s8.bf16 %v936
        %v957 = vunpack.c.l.s8.bf16 %v937
        %v958 = vunpack.c.l.s8.bf16 %v938
        %v959 = vunpack.c.h.s8.bf16 %v937
        %v960 = vunpack.c.h.s8.bf16 %v938
        %v961 = vunpack.c.l.s8.bf16 %v939
        %v962 = vunpack.c.l.s8.bf16 %v940
        %v963 = vunpack.c.h.s8.bf16 %v939
        %v964 = vunpack.c.h.s8.bf16 %v940
        %v965 = vunpack.c.l.s8.bf16 %v941
        %v966 = vunpack.c.l.s8.bf16 %v942
        %v967 = vunpack.c.h.s8.bf16 %v941
        %v968 = vunpack.c.h.s8.bf16 %v942
        %v969 = vunpack.c.l.s8.bf16 %v943
        %v970 = vunpack.c.l.s8.bf16 %v944
        %v971 = vunpack.c.h.s8.bf16 %v943
        %v972 = vunpack.c.h.s8.bf16 %v944
        %v973 = vunpack.c.l.s8.bf16 %v945
        %v974 = vunpack.c.l.s8.bf16 %v946
        %v975 = vunpack.c.h.s8.bf16 %v945
        %v976 = vunpack.c.h.s8.bf16 %v946
        %v977 = vunpack.c.l.s8.bf16 %v947
        %v978 = vunpack.c.l.s8.bf16 %v948
        %v979 = vunpack.c.h.s8.bf16 %v947
        %v980 = vunpack.c.h.s8.bf16 %v948
        %981 = vmatprep.subr.bf16.mxu0 0
        %982 = vmatpush1.bf16.msra.mxu0 %v917
        %983 = vmatprep.subr.bf16.mxu0 0
        %984 = vmatpush1.bf16.msra.mxu0 %v918
        %985 = vmatprep.subr.bf16.mxu0 0
        %986 = vmatpush1.bf16.msra.mxu0 %v919
        %987 = vmatprep.subr.bf16.mxu0 0
        %988 = vmatpush1.bf16.msra.mxu0 %v920
        %989 = vmatprep.subr.bf16.mxu0 0
        %990 = vmatpush1.bf16.msra.mxu0 %v921
        %991 = vmatprep.subr.bf16.mxu0 0
        %992 = vmatpush1.bf16.msra.mxu0 %v922
        %993 = vmatprep.subr.bf16.mxu0 0
        %994 = vmatpush1.bf16.msra.mxu0 %v923
        %995 = vmatprep.subr.bf16.mxu0 0
        %996 = vmatpush1.bf16.msra.mxu0 %v924
        %997 = vmatprep.subr.bf16.mxu0 0
        %998 = vmatpush1.bf16.msra.mxu0 %v925
        %999 = vmatprep.subr.bf16.mxu0 0
        %1000 = vmatpush1.bf16.msra.mxu0 %v926
        %1001 = vmatprep.subr.bf16.mxu0 0
        %1002 = vmatpush1.bf16.msra.mxu0 %v927
        %1003 = vmatprep.subr.bf16.mxu0 0
        %1004 = vmatpush1.bf16.msra.mxu0 %v928
        %1005 = vmatprep.subr.bf16.mxu0 0
        %1006 = vmatpush1.bf16.msra.mxu0 %v929
        %1007 = vmatprep.subr.bf16.mxu0 0
        %1008 = vmatpush1.bf16.msra.mxu0 %v930
        %1009 = vmatprep.subr.bf16.mxu0 0
        %1010 = vmatpush1.bf16.msra.mxu0 %v931
        %1011 = vmatprep.subr.bf16.mxu0 0
        %1012 = vmatpush1.bf16.msra.mxu0 %v932
        %1013 = vmatprep.mubr.bf16.mxu0 %v950
        %1014 = vmatmul.mubr.bf16.gmra.mrb[0].mxu0 %v949
        %v1015 = vpop.f32.mrb[0].mxu0
        %v1016 = vadd.f32 0.0, %v1015
        %v1017 = vpop.f32.mrb[0].mxu0
        %v1018 = vpop.f32.mrb[0].mxu0
        %v1019 = vadd.f32 0.0, %v1018
        %v1020 = vpop.f32.mrb[0].mxu0
        %1021 = vmatprep.mubr.bf16.mxu0 %v952
        %1022 = vmatmul.mubr.bf16.gmra.mrb[0].mxu0 %v951
        %v1023 = vpop.f32.mrb[0].mxu0
        %v1024 = vadd.f32 0.0, %v1023
        %v1025 = vpop.f32.mrb[0].mxu0
        %v1026 = vpop.f32.mrb[0].mxu0
        %v1027 = vadd.f32 0.0, %v1026
        %v1028 = vpop.f32.mrb[0].mxu0
        %1029 = vmatprep.mubr.bf16.mxu0 %v954
        %1030 = vmatmul.mubr.bf16.gmra.mrb[0].mxu0 %v953
        %v1031 = vpop.f32.mrb[0].mxu0
        %v1032 = vadd.f32 0.0, %v1031
        %v1033 = vpop.f32.mrb[0].mxu0
        %v1034 = vpop.f32.mrb[0].mxu0
        %v1035 = vadd.f32 0.0, %v1034
        %v1036 = vpop.f32.mrb[0].mxu0
        %1037 = vmatprep.mubr.bf16.mxu0 %v956
        %1038 = vmatmul.mubr.bf16.gmra.mrb[0].mxu0 %v955
        %v1039 = vpop.f32.mrb[0].mxu0
        %v1040 = vadd.f32 0.0, %v1039
        %v1041 = vpop.f32.mrb[0].mxu0
        %v1042 = vpop.f32.mrb[0].mxu0
        %v1043 = vadd.f32 0.0, %v1042
        %v1044 = vpop.f32.mrb[0].mxu0
        %1045 = vmatprep.mubr.bf16.mxu0 %v958
        %1046 = vmatmul.mubr.bf16.gmra.mrb[0].mxu0 %v957
        %v1047 = vpop.f32.mrb[0].mxu0
        %v1048 = vadd.f32 0.0, %v1047
        %v1049 = vpop.f32.mrb[0].mxu0
        %v1050 = vpop.f32.mrb[0].mxu0
        %v1051 = vadd.f32 0.0, %v1050
        %v1052 = vpop.f32.mrb[0].mxu0
        %1053 = vmatprep.mubr.bf16.mxu0 %v960
        %1054 = vmatmul.mubr.bf16.gmra.mrb[0].mxu0 %v959
        %v1055 = vpop.f32.mrb[0].mxu0
        %v1056 = vadd.f32 0.0, %v1055
        %v1057 = vpop.f32.mrb[0].mxu0
        %v1058 = vpop.f32.mrb[0].mxu0
        %v1059 = vadd.f32 0.0, %v1058
        %v1060 = vpop.f32.mrb[0].mxu0
        %1061 = vmatprep.mubr.bf16.mxu0 %v962
        %1062 = vmatmul.mubr.bf16.gmra.mrb[0].mxu0 %v961
        %v1063 = vpop.f32.mrb[0].mxu0
        %v1064 = vadd.f32 0.0, %v1063
        %v1065 = vpop.f32.mrb[0].mxu0
        %v1066 = vpop.f32.mrb[0].mxu0
        %v1067 = vadd.f32 0.0, %v1066
        %v1068 = vpop.f32.mrb[0].mxu0
        %1069 = vmatprep.mubr.bf16.mxu0 %v964
        %1070 = vmatmul.mubr.bf16.gmra.mrb[0].mxu0 %v963
        %v1071 = vpop.f32.mrb[0].mxu0
        %v1072 = vadd.f32 0.0, %v1071
        %v1073 = vpop.f32.mrb[0].mxu0
        %v1074 = vpop.f32.mrb[0].mxu0
        %v1075 = vadd.f32 0.0, %v1074
        %v1076 = vpop.f32.mrb[0].mxu0
        %1077 = vmatprep.mubr.bf16.mxu0 %v966
        %1078 = vmatmul.mubr.bf16.gmra.mrb[0].mxu0 %v965
        %v1079 = vpop.f32.mrb[0].mxu0
        %v1080 = vadd.f32 0.0, %v1079
        %v1081 = vpop.f32.mrb[0].mxu0
        %v1082 = vpop.f32.mrb[0].mxu0
        %v1083 = vadd.f32 0.0, %v1082
        %v1084 = vpop.f32.mrb[0].mxu0
        %1085 = vmatprep.mubr.bf16.mxu0 %v968
        %1086 = vmatmul.mubr.bf16.gmra.mrb[0].mxu0 %v967
        %v1087 = vpop.f32.mrb[0].mxu0
        %v1088 = vadd.f32 0.0, %v1087
        %v1089 = vpop.f32.mrb[0].mxu0
        %v1090 = vpop.f32.mrb[0].mxu0
        %v1091 = vadd.f32 0.0, %v1090
        %v1092 = vpop.f32.mrb[0].mxu0
        %1093 = vmatprep.mubr.bf16.mxu0 %v970
        %1094 = vmatmul.mubr.bf16.gmra.mrb[0].mxu0 %v969
        %v1095 = vpop.f32.mrb[0].mxu0
        %v1096 = vadd.f32 0.0, %v1095
        %v1097 = vpop.f32.mrb[0].mxu0
        %v1098 = vpop.f32.mrb[0].mxu0
        %v1099 = vadd.f32 0.0, %v1098
        %v1100 = vpop.f32.mrb[0].mxu0
        %1101 = vmatprep.mubr.bf16.mxu0 %v972
        %1102 = vmatmul.mubr.bf16.gmra.mrb[0].mxu0 %v971
        %v1103 = vpop.f32.mrb[0].mxu0
        %v1104 = vadd.f32 0.0, %v1103
        %v1105 = vpop.f32.mrb[0].mxu0
        %v1106 = vpop.f32.mrb[0].mxu0
        %v1107 = vadd.f32 0.0, %v1106
        %v1108 = vpop.f32.mrb[0].mxu0
        %1109 = vmatprep.mubr.bf16.mxu0 %v974
        %1110 = vmatmul.mubr.bf16.gmra.mrb[0].mxu0 %v973
        %v1111 = vpop.f32.mrb[0].mxu0
        %v1112 = vadd.f32 0.0, %v1111
        %v1113 = vpop.f32.mrb[0].mxu0
        %v1114 = vpop.f32.mrb[0].mxu0
        %v1115 = vadd.f32 0.0, %v1114
        %v1116 = vpop.f32.mrb[0].mxu0
        %1117 = vmatprep.mubr.bf16.mxu0 %v976
        %1118 = vmatmul.mubr.bf16.gmra.mrb[0].mxu0 %v975
        %v1119 = vpop.f32.mrb[0].mxu0
        %v1120 = vadd.f32 0.0, %v1119
        %v1121 = vpop.f32.mrb[0].mxu0
        %v1122 = vpop.f32.mrb[0].mxu0
        %v1123 = vadd.f32 0.0, %v1122
        %v1124 = vpop.f32.mrb[0].mxu0
        %1125 = vmatprep.mubr.bf16.mxu0 %v978
        %1126 = vmatmul.mubr.bf16.gmra.mrb[0].mxu0 %v977
        %v1127 = vpop.f32.mrb[0].mxu0
        %v1128 = vadd.f32 0.0, %v1127
        %v1129 = vpop.f32.mrb[0].mxu0
        %v1130 = vpop.f32.mrb[0].mxu0
        %v1131 = vadd.f32 0.0, %v1130
        %v1132 = vpop.f32.mrb[0].mxu0
        %1133 = vmatprep.mubr.bf16.mxu0 %v980
        %1134 = vmatmul.mubr.bf16.gmra.mrb[0].mxu0 %v979
        %v1135 = vpop.f32.mrb[0].mxu0
        %v1136 = vadd.f32 0.0, %v1135
        %v1137 = vpop.f32.mrb[0].mxu0
        %v1138 = vpop.f32.mrb[0].mxu0
        %v1139 = vadd.f32 0.0, %v1138
        %v1140 = vpop.f32.mrb[0].mxu0
        %1141 = vdwg.mxu0
        %v1142 = vpack.c.bf16 %v1019, %v1016
        %v1143 = vpack.c.bf16 %v1027, %v1024
        %v1144 = vpack.c.bf16 %v1035, %v1032
        %v1145 = vpack.c.bf16 %v1043, %v1040
        %v1146 = vpack.c.bf16 %v1051, %v1048
        %v1147 = vpack.c.bf16 %v1059, %v1056
        %v1148 = vpack.c.bf16 %v1067, %v1064
        %v1149 = vpack.c.bf16 %v1075, %v1072
        %v1150 = vpack.c.bf16 %v1083, %v1080
        %v1151 = vpack.c.bf16 %v1091, %v1088
        %v1152 = vpack.c.bf16 %v1099, %v1096
        %v1153 = vpack.c.bf16 %v1107, %v1104
        %v1154 = vpack.c.bf16 %v1115, %v1112
        %v1155 = vpack.c.bf16 %v1123, %v1120
        %v1156 = vpack.c.bf16 %v1131, %v1128
        %v1157 = vpack.c.bf16 %v1139, %v1136
        %v1158 = vld [vmem:[%s504] sm:$0xf]
        %v1159 = vld [vmem:[%s504 + $0x4] sm:$0xf]
        %v1160 = vld [vmem:[%s504 + $0x8] sm:$0xf]
        %v1161 = vld [vmem:[%s504 + $0xc] sm:$0xf]
        %v1162 = vld [vmem:[%s504 + $0x10] sm:$0xf]
        %v1163 = vld [vmem:[%s504 + $0x14] sm:$0xf]
        %v1164 = vld [vmem:[%s504 + $0x18] sm:$0xf]
        %v1165 = vld [vmem:[%s504 + $0x1c] sm:$0xf]
        %v1166 = vld [vmem:[%s504 + $0x20] sm:$0xf]
        %v1167 = vld [vmem:[%s504 + $0x24] sm:$0xf]
        %v1168 = vld [vmem:[%s504 + $0x28] sm:$0xf]
        %v1169 = vld [vmem:[%s504 + $0x2c] sm:$0xf]
        %v1170 = vld [vmem:[%s504 + $0x30] sm:$0xf]
        %v1171 = vld [vmem:[%s504 + $0x34] sm:$0xf]
        %v1172 = vld [vmem:[%s504 + $0x38] sm:$0xf]
        %v1173 = vld [vmem:[%s504 + $0x3c] sm:$0xf]
        %v1174 = vld [vmem:[%s507] sm:$0x1]
        %v1176 = vlaneseq
        %v1177 = vshrl.u32 %v1176, 7
        %v1178 = vsub.s32 0, %v1177
        %v1179 = vrot.slane %v1174, %v1178
        %v1197 = vunpack.c.l.b16 %v1158
        %v1198 = vunpack.c.l.b16 %v1159
        %v1199 = vunpack.c.l.b16 %v1160
        %v1200 = vunpack.c.l.b16 %v1161
        %v1201 = vunpack.c.l.b16 %v1162
        %v1202 = vunpack.c.l.b16 %v1163
        %v1203 = vunpack.c.l.b16 %v1164
        %v1204 = vunpack.c.l.b16 %v1165
        %v1205 = vunpack.c.l.b16 %v1166
        %v1206 = vunpack.c.l.b16 %v1167
        %v1207 = vunpack.c.l.b16 %v1168
        %v1208 = vunpack.c.l.b16 %v1169
        %v1209 = vunpack.c.l.b16 %v1170
        %v1210 = vunpack.c.l.b16 %v1171
        %v1211 = vunpack.c.l.b16 %v1172
        %v1212 = vunpack.c.l.b16 %v1173
        %v1213 = vpack.c.b16 %v1198, %v1197
        %v1214 = vpack.c.b16 %v1200, %v1199
        %v1215 = vpack.c.b16 %v1202, %v1201
        %v1216 = vpack.c.b16 %v1204, %v1203
        %v1217 = vpack.c.b16 %v1206, %v1205
        %v1218 = vpack.c.b16 %v1208, %v1207
        %v1219 = vpack.c.b16 %v1210, %v1209
        %v1220 = vpack.c.b16 %v1212, %v1211
        %1229 = vmatprep.subr.bf16.mxu0 0
        %1230 = vmatpush1.bf16.msra.mxu0 %v1213
        %1231 = vmatprep.subr.bf16.mxu0 0
        %1232 = vmatpush1.bf16.msra.mxu0 %v1214
        %1233 = vmatprep.subr.bf16.mxu0 0
        %1234 = vmatpush1.bf16.msra.mxu0 %v1215
        %1235 = vmatprep.subr.bf16.mxu0 0
        %1236 = vmatpush1.bf16.msra.mxu0 %v1216
        %1237 = vmatprep.subr.bf16.mxu0 0
        %1238 = vmatpush1.bf16.msra.mxu0 %v1217
        %1239 = vmatprep.subr.bf16.mxu0 0
        %1240 = vmatpush1.bf16.msra.mxu0 %v1218
        %1241 = vmatprep.subr.bf16.mxu0 0
        %1242 = vmatpush1.bf16.msra.mxu0 %v1219
        %1243 = vmatprep.subr.bf16.mxu0 0
        %1244 = vmatpush1.bf16.msra.mxu0 %v1220
        %1245 = vmatprep.subr.bf16.mxu0 0
        %1246 = vmatpush1.bf16.msra.mxu0 0
        %1247 = vmatprep.subr.bf16.mxu0 0
        %1248 = vmatpush1.bf16.msra.mxu0 0
        %1249 = vmatprep.subr.bf16.mxu0 0
        %1250 = vmatpush1.bf16.msra.mxu0 0
        %1251 = vmatprep.subr.bf16.mxu0 0
        %1252 = vmatpush1.bf16.msra.mxu0 0
        %1253 = vmatprep.subr.bf16.mxu0 0
        %1254 = vmatpush1.bf16.msra.mxu0 0
        %1255 = vmatprep.subr.bf16.mxu0 0
        %1256 = vmatpush1.bf16.msra.mxu0 0
        %1257 = vmatprep.subr.bf16.mxu0 0
        %1258 = vmatpush1.bf16.msra.mxu0 0
        %1259 = vmatprep.subr.bf16.mxu0 0
        %1260 = vmatpush1.bf16.msra.mxu0 0
        %1261 = vmatprep.mubr.bf16.mxu0 0
        %1262 = vmatmul.mubr.bf16.gmra.mrb[0].mxu0 %v1142
        %v1263 = vpop.f32.mrb[0].mxu0
        %v1264 = vadd.f32 %v1179, %v1263
        %v1265 = vpop.f32.mrb[0].mxu0
        %v1266 = vpop.f32.mrb[0].mxu0
        %v1267 = vadd.f32 %v1179, %v1266
        %v1268 = vpop.f32.mrb[0].mxu0
        %1269 = vmatprep.mubr.bf16.mxu0 0
        %1270 = vmatmul.mubr.bf16.gmra.mrb[0].mxu0 %v1143
        %v1271 = vpop.f32.mrb[0].mxu0
        %v1272 = vadd.f32 %v1179, %v1271
        %v1273 = vpop.f32.mrb[0].mxu0
        %v1274 = vpop.f32.mrb[0].mxu0
        %v1275 = vadd.f32 %v1179, %v1274
        %v1276 = vpop.f32.mrb[0].mxu0
        %1277 = vmatprep.mubr.bf16.mxu0 0
        %1278 = vmatmul.mubr.bf16.gmra.mrb[0].mxu0 %v1144
        %v1279 = vpop.f32.mrb[0].mxu0
        %v1280 = vadd.f32 %v1179, %v1279
        %v1281 = vpop.f32.mrb[0].mxu0
        %v1282 = vpop.f32.mrb[0].mxu0
        %v1283 = vadd.f32 %v1179, %v1282
        %v1284 = vpop.f32.mrb[0].mxu0
        %1285 = vmatprep.mubr.bf16.mxu0 0
        %1286 = vmatmul.mubr.bf16.gmra.mrb[0].mxu0 %v1145
        %v1287 = vpop.f32.mrb[0].mxu0
        %v1288 = vadd.f32 %v1179, %v1287
        %v1289 = vpop.f32.mrb[0].mxu0
        %v1290 = vpop.f32.mrb[0].mxu0
        %v1291 = vadd.f32 %v1179, %v1290
        %v1292 = vpop.f32.mrb[0].mxu0
        %1293 = vmatprep.mubr.bf16.mxu0 0
        %1294 = vmatmul.mubr.bf16.gmra.mrb[0].mxu0 %v1146
        %v1295 = vpop.f32.mrb[0].mxu0
        %v1296 = vadd.f32 %v1179, %v1295
        %v1297 = vpop.f32.mrb[0].mxu0
        %v1298 = vpop.f32.mrb[0].mxu0
        %v1299 = vadd.f32 %v1179, %v1298
        %v1300 = vpop.f32.mrb[0].mxu0
        %1301 = vmatprep.mubr.bf16.mxu0 0
        %1302 = vmatmul.mubr.bf16.gmra.mrb[0].mxu0 %v1147
        %v1303 = vpop.f32.mrb[0].mxu0
        %v1304 = vadd.f32 %v1179, %v1303
        %v1305 = vpop.f32.mrb[0].mxu0
        %v1306 = vpop.f32.mrb[0].mxu0
        %v1307 = vadd.f32 %v1179, %v1306
        %v1308 = vpop.f32.mrb[0].mxu0
        %1309 = vmatprep.mubr.bf16.mxu0 0
        %1310 = vmatmul.mubr.bf16.gmra.mrb[0].mxu0 %v1148
        %v1311 = vpop.f32.mrb[0].mxu0
        %v1312 = vadd.f32 %v1179, %v1311
        %v1313 = vpop.f32.mrb[0].mxu0
        %v1314 = vpop.f32.mrb[0].mxu0
        %v1315 = vadd.f32 %v1179, %v1314
        %v1316 = vpop.f32.mrb[0].mxu0
        %1317 = vmatprep.mubr.bf16.mxu0 0
        %1318 = vmatmul.mubr.bf16.gmra.mrb[0].mxu0 %v1149
        %v1319 = vpop.f32.mrb[0].mxu0
        %v1320 = vadd.f32 %v1179, %v1319
        %v1321 = vpop.f32.mrb[0].mxu0
        %v1322 = vpop.f32.mrb[0].mxu0
        %v1323 = vadd.f32 %v1179, %v1322
        %v1324 = vpop.f32.mrb[0].mxu0
        %1325 = vmatprep.mubr.bf16.mxu0 0
        %1326 = vmatmul.mubr.bf16.gmra.mrb[0].mxu0 %v1150
        %v1327 = vpop.f32.mrb[0].mxu0
        %v1328 = vadd.f32 %v1179, %v1327
        %v1329 = vpop.f32.mrb[0].mxu0
        %v1330 = vpop.f32.mrb[0].mxu0
        %v1331 = vadd.f32 %v1179, %v1330
        %v1332 = vpop.f32.mrb[0].mxu0
        %1333 = vmatprep.mubr.bf16.mxu0 0
        %1334 = vmatmul.mubr.bf16.gmra.mrb[0].mxu0 %v1151
        %v1335 = vpop.f32.mrb[0].mxu0
        %v1336 = vadd.f32 %v1179, %v1335
        %v1337 = vpop.f32.mrb[0].mxu0
        %v1338 = vpop.f32.mrb[0].mxu0
        %v1339 = vadd.f32 %v1179, %v1338
        %v1340 = vpop.f32.mrb[0].mxu0
        %1341 = vmatprep.mubr.bf16.mxu0 0
        %1342 = vmatmul.mubr.bf16.gmra.mrb[0].mxu0 %v1152
        %v1343 = vpop.f32.mrb[0].mxu0
        %v1344 = vadd.f32 %v1179, %v1343
        %v1345 = vpop.f32.mrb[0].mxu0
        %v1346 = vpop.f32.mrb[0].mxu0
        %v1347 = vadd.f32 %v1179, %v1346
        %v1348 = vpop.f32.mrb[0].mxu0
        %1349 = vmatprep.mubr.bf16.mxu0 0
        %1350 = vmatmul.mubr.bf16.gmra.mrb[0].mxu0 %v1153
        %v1351 = vpop.f32.mrb[0].mxu0
        %v1352 = vadd.f32 %v1179, %v1351
        %v1353 = vpop.f32.mrb[0].mxu0
        %v1354 = vpop.f32.mrb[0].mxu0
        %v1355 = vadd.f32 %v1179, %v1354
        %v1356 = vpop.f32.mrb[0].mxu0
        %1357 = vmatprep.mubr.bf16.mxu0 0
        %1358 = vmatmul.mubr.bf16.gmra.mrb[0].mxu0 %v1154
        %v1359 = vpop.f32.mrb[0].mxu0
        %v1360 = vadd.f32 %v1179, %v1359
        %v1361 = vpop.f32.mrb[0].mxu0
        %v1362 = vpop.f32.mrb[0].mxu0
        %v1363 = vadd.f32 %v1179, %v1362
        %v1364 = vpop.f32.mrb[0].mxu0
        %1365 = vmatprep.mubr.bf16.mxu0 0
        %1366 = vmatmul.mubr.bf16.gmra.mrb[0].mxu0 %v1155
        %v1367 = vpop.f32.mrb[0].mxu0
        %v1368 = vadd.f32 %v1179, %v1367
        %v1369 = vpop.f32.mrb[0].mxu0
        %v1370 = vpop.f32.mrb[0].mxu0
        %v1371 = vadd.f32 %v1179, %v1370
        %v1372 = vpop.f32.mrb[0].mxu0
        %1373 = vmatprep.mubr.bf16.mxu0 0
        %1374 = vmatmul.mubr.bf16.gmra.mrb[0].mxu0 %v1156
        %v1375 = vpop.f32.mrb[0].mxu0
        %v1376 = vadd.f32 %v1179, %v1375
        %v1377 = vpop.f32.mrb[0].mxu0
        %v1378 = vpop.f32.mrb[0].mxu0
        %v1379 = vadd.f32 %v1179, %v1378
        %v1380 = vpop.f32.mrb[0].mxu0
        %1381 = vmatprep.mubr.bf16.mxu0 0
        %1382 = vmatmul.mubr.bf16.gmra.mrb[0].mxu0 %v1157
        %v1383 = vpop.f32.mrb[0].mxu0
        %v1384 = vadd.f32 %v1179, %v1383
        %v1385 = vpop.f32.mrb[0].mxu0
        %v1386 = vpop.f32.mrb[0].mxu0
        %v1387 = vadd.f32 %v1179, %v1386
        %v1388 = vpop.f32.mrb[0].mxu0
        %1389 = vdwg.mxu0
        %v1390 = vmax.f32 %v1264, 0.0
        %v1391 = vmax.f32 %v1267, 0.0
        %v1392 = vmax.f32 %v1272, 0.0
        %v1393 = vmax.f32 %v1275, 0.0
        %v1394 = vmax.f32 %v1280, 0.0
        %v1395 = vmax.f32 %v1283, 0.0
        %v1396 = vmax.f32 %v1288, 0.0
        %v1397 = vmax.f32 %v1291, 0.0
        %v1398 = vmax.f32 %v1296, 0.0
        %v1399 = vmax.f32 %v1299, 0.0
        %v1400 = vmax.f32 %v1304, 0.0
        %v1401 = vmax.f32 %v1307, 0.0
        %v1402 = vmax.f32 %v1312, 0.0
        %v1403 = vmax.f32 %v1315, 0.0
        %v1404 = vmax.f32 %v1320, 0.0
        %v1405 = vmax.f32 %v1323, 0.0
        %v1406 = vmax.f32 %v1328, 0.0
        %v1407 = vmax.f32 %v1331, 0.0
        %v1408 = vmax.f32 %v1336, 0.0
        %v1409 = vmax.f32 %v1339, 0.0
        %v1410 = vmax.f32 %v1344, 0.0
        %v1411 = vmax.f32 %v1347, 0.0
        %v1412 = vmax.f32 %v1352, 0.0
        %v1413 = vmax.f32 %v1355, 0.0
        %v1414 = vmax.f32 %v1360, 0.0
        %v1415 = vmax.f32 %v1363, 0.0
        %v1416 = vmax.f32 %v1368, 0.0
        %v1417 = vmax.f32 %v1371, 0.0
        %v1418 = vmax.f32 %v1376, 0.0
        %v1419 = vmax.f32 %v1379, 0.0
        %v1420 = vmax.f32 %v1384, 0.0
        %v1421 = vmax.f32 %v1387, 0.0
        %v1422 = vpack.c.bf16 %v1391, %v1390
        %v1423 = vpack.c.bf16 %v1393, %v1392
        %v1424 = vpack.c.bf16 %v1395, %v1394
        %v1425 = vpack.c.bf16 %v1397, %v1396
        %v1426 = vpack.c.bf16 %v1399, %v1398
        %v1427 = vpack.c.bf16 %v1401, %v1400
        %v1428 = vpack.c.bf16 %v1403, %v1402
        %v1429 = vpack.c.bf16 %v1405, %v1404
        %v1430 = vpack.c.bf16 %v1407, %v1406
        %v1431 = vpack.c.bf16 %v1409, %v1408
        %v1432 = vpack.c.bf16 %v1411, %v1410
        %v1433 = vpack.c.bf16 %v1413, %v1412
        %v1434 = vpack.c.bf16 %v1415, %v1414
        %v1435 = vpack.c.bf16 %v1417, %v1416
        %v1436 = vpack.c.bf16 %v1419, %v1418
        %v1437 = vpack.c.bf16 %v1421, %v1420
        %v1438 = vld [vmem:[%s451] sm:$0xf]
        %v1439 = vld [vmem:[%s451 + $0x4] sm:$0xf]
        %v1440 = vld [vmem:[%s451 + $0x8] sm:$0xf]
        %v1441 = vld [vmem:[%s451 + $0xc] sm:$0xf]
        %v1442 = vld [vmem:[%s451 + $0x10] sm:$0xf]
        %v1443 = vld [vmem:[%s451 + $0x14] sm:$0xf]
        %v1444 = vld [vmem:[%s451 + $0x18] sm:$0xf]
        %v1445 = vld [vmem:[%s451 + $0x1c] sm:$0xf]
        %v1446 = vld [vmem:[%s451 + $0x20] sm:$0xf]
        %v1447 = vld [vmem:[%s451 + $0x24] sm:$0xf]
        %v1448 = vld [vmem:[%s451 + $0x28] sm:$0xf]
        %v1449 = vld [vmem:[%s451 + $0x2c] sm:$0xf]
        %v1450 = vld [vmem:[%s451 + $0x30] sm:$0xf]
        %v1451 = vld [vmem:[%s451 + $0x34] sm:$0xf]
        %v1452 = vld [vmem:[%s451 + $0x38] sm:$0xf]
        %v1453 = vld [vmem:[%s451 + $0x3c] sm:$0xf]
        %v1454 = vld [vmem:[%s510] sm:$0x1]
        %v1456 = vlaneseq
        %v1457 = vshrl.u32 %v1456, 7
        %v1458 = vsub.s32 0, %v1457
        %v1459 = vrot.slane %v1454, %v1458
        %v1477 = vunpack.c.l.b16 %v1438
        %v1478 = vunpack.c.l.b16 %v1439
        %v1479 = vunpack.c.l.b16 %v1440
        %v1480 = vunpack.c.l.b16 %v1441
        %v1481 = vunpack.c.l.b16 %v1442
        %v1482 = vunpack.c.l.b16 %v1443
        %v1483 = vunpack.c.l.b16 %v1444
        %v1484 = vunpack.c.l.b16 %v1445
        %v1485 = vunpack.c.l.b16 %v1446
        %v1486 = vunpack.c.l.b16 %v1447
        %v1487 = vunpack.c.l.b16 %v1448
        %v1488 = vunpack.c.l.b16 %v1449
        %v1489 = vunpack.c.l.b16 %v1450
        %v1490 = vunpack.c.l.b16 %v1451
        %v1491 = vunpack.c.l.b16 %v1452
        %v1492 = vunpack.c.l.b16 %v1453
        %v1493 = vpack.c.b16 %v1478, %v1477
        %v1494 = vpack.c.b16 %v1480, %v1479
        %v1495 = vpack.c.b16 %v1482, %v1481
        %v1496 = vpack.c.b16 %v1484, %v1483
        %v1497 = vpack.c.b16 %v1486, %v1485
        %v1498 = vpack.c.b16 %v1488, %v1487
        %v1499 = vpack.c.b16 %v1490, %v1489
        %v1500 = vpack.c.b16 %v1492, %v1491
        %1509 = vmatprep.subr.bf16.mxu0 0
        %1510 = vmatpush1.bf16.msra.mxu0 %v1493
        %1511 = vmatprep.subr.bf16.mxu0 0
        %1512 = vmatpush1.bf16.msra.mxu0 %v1494
        %1513 = vmatprep.subr.bf16.mxu0 0
        %1514 = vmatpush1.bf16.msra.mxu0 %v1495
        %1515 = vmatprep.subr.bf16.mxu0 0
        %1516 = vmatpush1.bf16.msra.mxu0 %v1496
        %1517 = vmatprep.subr.bf16.mxu0 0
        %1518 = vmatpush1.bf16.msra.mxu0 %v1497
        %1519 = vmatprep.subr.bf16.mxu0 0
        %1520 = vmatpush1.bf16.msra.mxu0 %v1498
        %1521 = vmatprep.subr.bf16.mxu0 0
        %1522 = vmatpush1.bf16.msra.mxu0 %v1499
        %1523 = vmatprep.subr.bf16.mxu0 0
        %1524 = vmatpush1.bf16.msra.mxu0 %v1500
        %1525 = vmatprep.subr.bf16.mxu0 0
        %1526 = vmatpush1.bf16.msra.mxu0 0
        %1527 = vmatprep.subr.bf16.mxu0 0
        %1528 = vmatpush1.bf16.msra.mxu0 0
        %1529 = vmatprep.subr.bf16.mxu0 0
        %1530 = vmatpush1.bf16.msra.mxu0 0
        %1531 = vmatprep.subr.bf16.mxu0 0
        %1532 = vmatpush1.bf16.msra.mxu0 0
        %1533 = vmatprep.subr.bf16.mxu0 0
        %1534 = vmatpush1.bf16.msra.mxu0 0
        %1535 = vmatprep.subr.bf16.mxu0 0
        %1536 = vmatpush1.bf16.msra.mxu0 0
        %1537 = vmatprep.subr.bf16.mxu0 0
        %1538 = vmatpush1.bf16.msra.mxu0 0
        %1539 = vmatprep.subr.bf16.mxu0 0
        %1540 = vmatpush1.bf16.msra.mxu0 0
        %1541 = vmatprep.mubr.bf16.mxu0 0
        %1542 = vmatmul.mubr.bf16.gmra.mrb[0].mxu0 %v1422
        %v1543 = vpop.f32.mrb[0].mxu0
        %v1544 = vadd.f32 %v1459, %v1543
        %v1545 = vpop.f32.mrb[0].mxu0
        %v1546 = vpop.f32.mrb[0].mxu0
        %v1547 = vadd.f32 %v1459, %v1546
        %v1548 = vpop.f32.mrb[0].mxu0
        %1549 = vmatprep.mubr.bf16.mxu0 0
        %1550 = vmatmul.mubr.bf16.gmra.mrb[0].mxu0 %v1423
        %v1551 = vpop.f32.mrb[0].mxu0
        %v1552 = vadd.f32 %v1459, %v1551
        %v1553 = vpop.f32.mrb[0].mxu0
        %v1554 = vpop.f32.mrb[0].mxu0
        %v1555 = vadd.f32 %v1459, %v1554
        %v1556 = vpop.f32.mrb[0].mxu0
        %1557 = vmatprep.mubr.bf16.mxu0 0
        %1558 = vmatmul.mubr.bf16.gmra.mrb[0].mxu0 %v1424
        %v1559 = vpop.f32.mrb[0].mxu0
        %v1560 = vadd.f32 %v1459, %v1559
        %v1561 = vpop.f32.mrb[0].mxu0
        %v1562 = vpop.f32.mrb[0].mxu0
        %v1563 = vadd.f32 %v1459, %v1562
        %v1564 = vpop.f32.mrb[0].mxu0
        %1565 = vmatprep.mubr.bf16.mxu0 0
        %1566 = vmatmul.mubr.bf16.gmra.mrb[0].mxu0 %v1425
        %v1567 = vpop.f32.mrb[0].mxu0
        %v1568 = vadd.f32 %v1459, %v1567
        %v1569 = vpop.f32.mrb[0].mxu0
        %v1570 = vpop.f32.mrb[0].mxu0
        %v1571 = vadd.f32 %v1459, %v1570
        %v1572 = vpop.f32.mrb[0].mxu0
        %1573 = vmatprep.mubr.bf16.mxu0 0
        %1574 = vmatmul.mubr.bf16.gmra.mrb[0].mxu0 %v1426
        %v1575 = vpop.f32.mrb[0].mxu0
        %v1576 = vadd.f32 %v1459, %v1575
        %v1577 = vpop.f32.mrb[0].mxu0
        %v1578 = vpop.f32.mrb[0].mxu0
        %v1579 = vadd.f32 %v1459, %v1578
        %v1580 = vpop.f32.mrb[0].mxu0
        %1581 = vmatprep.mubr.bf16.mxu0 0
        %1582 = vmatmul.mubr.bf16.gmra.mrb[0].mxu0 %v1427
        %v1583 = vpop.f32.mrb[0].mxu0
        %v1584 = vadd.f32 %v1459, %v1583
        %v1585 = vpop.f32.mrb[0].mxu0
        %v1586 = vpop.f32.mrb[0].mxu0
        %v1587 = vadd.f32 %v1459, %v1586
        %v1588 = vpop.f32.mrb[0].mxu0
        %1589 = vmatprep.mubr.bf16.mxu0 0
        %1590 = vmatmul.mubr.bf16.gmra.mrb[0].mxu0 %v1428
        %v1591 = vpop.f32.mrb[0].mxu0
        %v1592 = vadd.f32 %v1459, %v1591
        %v1593 = vpop.f32.mrb[0].mxu0
        %v1594 = vpop.f32.mrb[0].mxu0
        %v1595 = vadd.f32 %v1459, %v1594
        %v1596 = vpop.f32.mrb[0].mxu0
        %1597 = vmatprep.mubr.bf16.mxu0 0
        %1598 = vmatmul.mubr.bf16.gmra.mrb[0].mxu0 %v1429
        %v1599 = vpop.f32.mrb[0].mxu0
        %v1600 = vadd.f32 %v1459, %v1599
        %v1601 = vpop.f32.mrb[0].mxu0
        %v1602 = vpop.f32.mrb[0].mxu0
        %v1603 = vadd.f32 %v1459, %v1602
        %v1604 = vpop.f32.mrb[0].mxu0
        %1605 = vmatprep.mubr.bf16.mxu0 0
        %1606 = vmatmul.mubr.bf16.gmra.mrb[0].mxu0 %v1430
        %v1607 = vpop.f32.mrb[0].mxu0
        %v1608 = vadd.f32 %v1459, %v1607
        %v1609 = vpop.f32.mrb[0].mxu0
        %v1610 = vpop.f32.mrb[0].mxu0
        %v1611 = vadd.f32 %v1459, %v1610
        %v1612 = vpop.f32.mrb[0].mxu0
        %1613 = vmatprep.mubr.bf16.mxu0 0
        %1614 = vmatmul.mubr.bf16.gmra.mrb[0].mxu0 %v1431
        %v1615 = vpop.f32.mrb[0].mxu0
        %v1616 = vadd.f32 %v1459, %v1615
        %v1617 = vpop.f32.mrb[0].mxu0
        %v1618 = vpop.f32.mrb[0].mxu0
        %v1619 = vadd.f32 %v1459, %v1618
        %v1620 = vpop.f32.mrb[0].mxu0
        %1621 = vmatprep.mubr.bf16.mxu0 0
        %1622 = vmatmul.mubr.bf16.gmra.mrb[0].mxu0 %v1432
        %v1623 = vpop.f32.mrb[0].mxu0
        %v1624 = vadd.f32 %v1459, %v1623
        %v1625 = vpop.f32.mrb[0].mxu0
        %v1626 = vpop.f32.mrb[0].mxu0
        %v1627 = vadd.f32 %v1459, %v1626
        %v1628 = vpop.f32.mrb[0].mxu0
        %1629 = vmatprep.mubr.bf16.mxu0 0
        %1630 = vmatmul.mubr.bf16.gmra.mrb[0].mxu0 %v1433
        %v1631 = vpop.f32.mrb[0].mxu0
        %v1632 = vadd.f32 %v1459, %v1631
        %v1633 = vpop.f32.mrb[0].mxu0
        %v1634 = vpop.f32.mrb[0].mxu0
        %v1635 = vadd.f32 %v1459, %v1634
        %v1636 = vpop.f32.mrb[0].mxu0
        %1637 = vmatprep.mubr.bf16.mxu0 0
        %1638 = vmatmul.mubr.bf16.gmra.mrb[0].mxu0 %v1434
        %v1639 = vpop.f32.mrb[0].mxu0
        %v1640 = vadd.f32 %v1459, %v1639
        %v1641 = vpop.f32.mrb[0].mxu0
        %v1642 = vpop.f32.mrb[0].mxu0
        %v1643 = vadd.f32 %v1459, %v1642
        %v1644 = vpop.f32.mrb[0].mxu0
        %1645 = vmatprep.mubr.bf16.mxu0 0
        %1646 = vmatmul.mubr.bf16.gmra.mrb[0].mxu0 %v1435
        %v1647 = vpop.f32.mrb[0].mxu0
        %v1648 = vadd.f32 %v1459, %v1647
        %v1649 = vpop.f32.mrb[0].mxu0
        %v1650 = vpop.f32.mrb[0].mxu0
        %v1651 = vadd.f32 %v1459, %v1650
        %v1652 = vpop.f32.mrb[0].mxu0
        %1653 = vmatprep.mubr.bf16.mxu0 0
        %1654 = vmatmul.mubr.bf16.gmra.mrb[0].mxu0 %v1436
        %v1655 = vpop.f32.mrb[0].mxu0
        %v1656 = vadd.f32 %v1459, %v1655
        %v1657 = vpop.f32.mrb[0].mxu0
        %v1658 = vpop.f32.mrb[0].mxu0
        %v1659 = vadd.f32 %v1459, %v1658
        %v1660 = vpop.f32.mrb[0].mxu0
        %1661 = vmatprep.mubr.bf16.mxu0 0
        %1662 = vmatmul.mubr.bf16.gmra.mrb[0].mxu0 %v1437
        %v1663 = vpop.f32.mrb[0].mxu0
        %v1664 = vadd.f32 %v1459, %v1663
        %v1665 = vpop.f32.mrb[0].mxu0
        %v1666 = vpop.f32.mrb[0].mxu0
        %v1667 = vadd.f32 %v1459, %v1666
        %v1668 = vpop.f32.mrb[0].mxu0
        %1669 = vdwg.mxu0
        %v1670 = vmax.f32 %v1544, 0.0
        %v1671 = vmax.f32 %v1547, 0.0
        %v1672 = vmax.f32 %v1552, 0.0
        %v1673 = vmax.f32 %v1555, 0.0
        %v1674 = vmax.f32 %v1560, 0.0
        %v1675 = vmax.f32 %v1563, 0.0
        %v1676 = vmax.f32 %v1568, 0.0
        %v1677 = vmax.f32 %v1571, 0.0
        %v1678 = vmax.f32 %v1576, 0.0
        %v1679 = vmax.f32 %v1579, 0.0
        %v1680 = vmax.f32 %v1584, 0.0
        %v1681 = vmax.f32 %v1587, 0.0
        %v1682 = vmax.f32 %v1592, 0.0
        %v1683 = vmax.f32 %v1595, 0.0
        %v1684 = vmax.f32 %v1600, 0.0
        %v1685 = vmax.f32 %v1603, 0.0
        %v1686 = vmax.f32 %v1608, 0.0
        %v1687 = vmax.f32 %v1611, 0.0
        %v1688 = vmax.f32 %v1616, 0.0
        %v1689 = vmax.f32 %v1619, 0.0
        %v1690 = vmax.f32 %v1624, 0.0
        %v1691 = vmax.f32 %v1627, 0.0
        %v1692 = vmax.f32 %v1632, 0.0
        %v1693 = vmax.f32 %v1635, 0.0
        %v1694 = vmax.f32 %v1640, 0.0
        %v1695 = vmax.f32 %v1643, 0.0
        %v1696 = vmax.f32 %v1648, 0.0
        %v1697 = vmax.f32 %v1651, 0.0
        %v1698 = vmax.f32 %v1656, 0.0
        %v1699 = vmax.f32 %v1659, 0.0
        %v1700 = vmax.f32 %v1664, 0.0
        %v1701 = vmax.f32 %v1667, 0.0
        %v1702 = vadd.f32 %v885, %v1670
        %v1703 = vadd.f32 %v886, %v1671
        %v1704 = vadd.f32 %v887, %v1672
        %v1705 = vadd.f32 %v888, %v1673
        %v1706 = vadd.f32 %v889, %v1674
        %v1707 = vadd.f32 %v890, %v1675
        %v1708 = vadd.f32 %v891, %v1676
        %v1709 = vadd.f32 %v892, %v1677
        %v1710 = vadd.f32 %v893, %v1678
        %v1711 = vadd.f32 %v894, %v1679
        %v1712 = vadd.f32 %v895, %v1680
        %v1713 = vadd.f32 %v896, %v1681
        %v1714 = vadd.f32 %v897, %v1682
        %v1715 = vadd.f32 %v898, %v1683
        %v1716 = vadd.f32 %v899, %v1684
        %v1717 = vadd.f32 %v900, %v1685
        %v1718 = vadd.f32 %v901, %v1686
        %v1719 = vadd.f32 %v902, %v1687
        %v1720 = vadd.f32 %v903, %v1688
        %v1721 = vadd.f32 %v904, %v1689
        %v1722 = vadd.f32 %v905, %v1690
        %v1723 = vadd.f32 %v906, %v1691
        %v1724 = vadd.f32 %v907, %v1692
        %v1725 = vadd.f32 %v908, %v1693
        %v1726 = vadd.f32 %v909, %v1694
        %v1727 = vadd.f32 %v910, %v1695
        %v1728 = vadd.f32 %v911, %v1696
        %v1729 = vadd.f32 %v912, %v1697
        %v1730 = vadd.f32 %v913, %v1698
        %v1731 = vadd.f32 %v914, %v1699
        %v1732 = vadd.f32 %v915, %v1700
        %v1733 = vadd.f32 %v916, %v1701
        %1734 = vst [vmem:[#allocation2] sm:$0xff] %v1702
        %1735 = vst [vmem:[#allocation2 + $0x8] sm:$0xff] %v1703
        %1736 = vst [vmem:[#allocation2 + $0x10] sm:$0xff] %v1704
        %1737 = vst [vmem:[#allocation2 + $0x18] sm:$0xff] %v1705
        %1738 = vst [vmem:[#allocation2 + $0x20] sm:$0xff] %v1706
        %1739 = vst [vmem:[#allocation2 + $0x28] sm:$0xff] %v1707
        %1740 = vst [vmem:[#allocation2 + $0x30] sm:$0xff] %v1708
        %1741 = vst [vmem:[#allocation2 + $0x38] sm:$0xff] %v1709
        %1742 = vst [vmem:[#allocation2 + $0x40] sm:$0xff] %v1710
        %1743 = vst [vmem:[#allocation2 + $0x48] sm:$0xff] %v1711
        %1744 = vst [vmem:[#allocation2 + $0x50] sm:$0xff] %v1712
        %1745 = vst [vmem:[#allocation2 + $0x58] sm:$0xff] %v1713
        %1746 = vst [vmem:[#allocation2 + $0x60] sm:$0xff] %v1714
        %1747 = vst [vmem:[#allocation2 + $0x68] sm:$0xff] %v1715
        %1748 = vst [vmem:[#allocation2 + $0x70] sm:$0xff] %v1716
        %1749 = vst [vmem:[#allocation2 + $0x78] sm:$0xff] %v1717
        %1750 = vst [vmem:[#allocation2 + $0x80] sm:$0xff] %v1718
        %1751 = vst [vmem:[#allocation2 + $0x88] sm:$0xff] %v1719
        %1752 = vst [vmem:[#allocation2 + $0x90] sm:$0xff] %v1720
        %1753 = vst [vmem:[#allocation2 + $0x98] sm:$0xff] %v1721
        %1754 = vst [vmem:[#allocation2 + $0xa0] sm:$0xff] %v1722
        %1755 = vst [vmem:[#allocation2 + $0xa8] sm:$0xff] %v1723
        %1756 = vst [vmem:[#allocation2 + $0xb0] sm:$0xff] %v1724
        %1757 = vst [vmem:[#allocation2 + $0xb8] sm:$0xff] %v1725
        %1758 = vst [vmem:[#allocation2 + $0xc0] sm:$0xff] %v1726
        %1759 = vst [vmem:[#allocation2 + $0xc8] sm:$0xff] %v1727
        %1760 = vst [vmem:[#allocation2 + $0xd0] sm:$0xff] %v1728
        %1761 = vst [vmem:[#allocation2 + $0xd8] sm:$0xff] %v1729
        %1762 = vst [vmem:[#allocation2 + $0xe0] sm:$0xff] %v1730
        %1763 = vst [vmem:[#allocation2 + $0xe8] sm:$0xff] %v1731
        %1764 = vst [vmem:[#allocation2 + $0xf0] sm:$0xff] %v1732
        %1765 = vst [vmem:[#allocation2 + $0xf8] sm:$0xff] %v1733
        %p1766 = scmp.eq.s32.totalorder %s30, 2
        // Predicated region
        $region85: #{tpu_custom_call.1} parent=71 // pred_check
          %p1767 = pneg %p1766
        $region86: #{tpu_custom_call.1} parent=71 // pred_check_branch
          %1769 = sbr.rel (%p1767) target = $region88
        $region87: #{tpu_custom_call.1} parent=71 // pred_region
          %v1770 = vld [vmem:[%s2] sm:$0x3]
          %v1771 = vld [vmem:[#allocation2] sm:$0xff]
          %v1772 = vld [vmem:[#allocation2 + $0x8] sm:$0xff]
          %v1773 = vld [vmem:[#allocation2 + $0x10] sm:$0xff]
          %v1774 = vld [vmem:[#allocation2 + $0x18] sm:$0xff]
          %v1775 = vld [vmem:[#allocation2 + $0x20] sm:$0xff]
          %v1776 = vld [vmem:[#allocation2 + $0x28] sm:$0xff]
          %v1777 = vld [vmem:[#allocation2 + $0x30] sm:$0xff]
          %v1778 = vld [vmem:[#allocation2 + $0x38] sm:$0xff]
          %v1779 = vld [vmem:[#allocation2 + $0x40] sm:$0xff]
          %v1780 = vld [vmem:[#allocation2 + $0x48] sm:$0xff]
          %v1781 = vld [vmem:[#allocation2 + $0x50] sm:$0xff]
          %v1782 = vld [vmem:[#allocation2 + $0x58] sm:$0xff]
          %v1783 = vld [vmem:[#allocation2 + $0x60] sm:$0xff]
          %v1784 = vld [vmem:[#allocation2 + $0x68] sm:$0xff]
          %v1785 = vld [vmem:[#allocation2 + $0x70] sm:$0xff]
          %v1786 = vld [vmem:[#allocation2 + $0x78] sm:$0xff]
          %v1787 = vld [vmem:[#allocation2 + $0x80] sm:$0xff]
          %v1788 = vld [vmem:[#allocation2 + $0x88] sm:$0xff]
          %v1789 = vld [vmem:[#allocation2 + $0x90] sm:$0xff]
          %v1790 = vld [vmem:[#allocation2 + $0x98] sm:$0xff]
          %v1791 = vld [vmem:[#allocation2 + $0xa0] sm:$0xff]
          %v1792 = vld [vmem:[#allocation2 + $0xa8] sm:$0xff]
          %v1793 = vld [vmem:[#allocation2 + $0xb0] sm:$0xff]
          %v1794 = vld [vmem:[#allocation2 + $0xb8] sm:$0xff]
          %v1795 = vld [vmem:[#allocation2 + $0xc0] sm:$0xff]
          %v1796 = vld [vmem:[#allocation2 + $0xc8] sm:$0xff]
          %v1797 = vld [vmem:[#allocation2 + $0xd0] sm:$0xff]
          %v1798 = vld [vmem:[#allocation2 + $0xd8] sm:$0xff]
          %v1799 = vld [vmem:[#allocation2 + $0xe0] sm:$0xff]
          %v1800 = vld [vmem:[#allocation2 + $0xe8] sm:$0xff]
          %v1801 = vld [vmem:[#allocation2 + $0xf0] sm:$0xff]
          %v1802 = vld [vmem:[#allocation2 + $0xf8] sm:$0xff]
          %v1803 = vpack.c.bf16 %v1772, %v1771
          %v1804 = vpack.c.bf16 %v1774, %v1773
          %v1805 = vpack.c.bf16 %v1776, %v1775
          %v1806 = vpack.c.bf16 %v1778, %v1777
          %v1807 = vpack.c.bf16 %v1780, %v1779
          %v1808 = vpack.c.bf16 %v1782, %v1781
          %v1809 = vpack.c.bf16 %v1784, %v1783
          %v1810 = vpack.c.bf16 %v1786, %v1785
          %v1811 = vpack.c.bf16 %v1788, %v1787
          %v1812 = vpack.c.bf16 %v1790, %v1789
          %v1813 = vpack.c.bf16 %v1792, %v1791
          %v1814 = vpack.c.bf16 %v1794, %v1793
          %v1815 = vpack.c.bf16 %v1796, %v1795
          %v1816 = vpack.c.bf16 %v1798, %v1797
          %v1817 = vpack.c.bf16 %v1800, %v1799
          %v1818 = vpack.c.bf16 %v1802, %v1801
          %v1821 = vunpack.c.l.s4 1966171168
          %v1822 = vunpack.c.0.s8 %v1821
          %v1823 = vlaneseq
          %v1824 = vshrl.u32 %v1823, 7
          %v1825 = vsub.s32 %v1822, %v1824
          %v1826 = vrot.slane %v1770, %v1825
          %v1827 = vcombine.high %v1826, %v1826
          %v1829 = vunpack.c.l.s4 1966171168
          %v1830 = vunpack.c.0.s8 %v1829
          %v1831 = vlaneseq
          %v1832 = vshrl.u32 %v1831, 7
          %v1833 = vsub.s32 %v1830, %v1832
          %v1834 = vrot.slane %v1826, %v1833
          %v1836 = vunpack.c.l.s4 1966171168
          %v1837 = vunpack.c.0.s8 %v1836
          %v1838 = vlaneseq
          %v1839 = vshrl.u32 %v1838, 7
          %v1840 = vsub.s32 %v1837, %v1839
          %v1841 = vrot.slane %v1827, %v1840
          %1844 = vmatprep.subr.bf16.mxu0 0
          %1845 = vmatpush1.bf16.msra.mxu0 %v1803
          %1846 = vmatprep.subr.bf16.mxu0 0
          %1847 = vmatpush1.bf16.msra.mxu0 %v1804
          %1848 = vmatprep.subr.bf16.mxu0 0
          %1849 = vmatpush1.bf16.msra.mxu0 %v1805
          %1850 = vmatprep.subr.bf16.mxu0 0
          %1851 = vmatpush1.bf16.msra.mxu0 %v1806
          %1852 = vmatprep.subr.bf16.mxu0 0
          %1853 = vmatpush1.bf16.msra.mxu0 %v1807
          %1854 = vmatprep.subr.bf16.mxu0 0
          %1855 = vmatpush1.bf16.msra.mxu0 %v1808
          %1856 = vmatprep.subr.bf16.mxu0 0
          %1857 = vmatpush1.bf16.msra.mxu0 %v1809
          %1858 = vmatprep.subr.bf16.mxu0 0
          %1859 = vmatpush1.bf16.msra.mxu0 %v1810
          %1860 = vmatprep.subr.bf16.mxu0 0
          %1861 = vmatpush1.bf16.msra.mxu0 %v1811
          %1862 = vmatprep.subr.bf16.mxu0 0
          %1863 = vmatpush1.bf16.msra.mxu0 %v1812
          %1864 = vmatprep.subr.bf16.mxu0 0
          %1865 = vmatpush1.bf16.msra.mxu0 %v1813
          %1866 = vmatprep.subr.bf16.mxu0 0
          %1867 = vmatpush1.bf16.msra.mxu0 %v1814
          %1868 = vmatprep.subr.bf16.mxu0 0
          %1869 = vmatpush1.bf16.msra.mxu0 %v1815
          %1870 = vmatprep.subr.bf16.mxu0 0
          %1871 = vmatpush1.bf16.msra.mxu0 %v1816
          %1872 = vmatprep.subr.bf16.mxu0 0
          %1873 = vmatpush1.bf16.msra.mxu0 %v1817
          %1874 = vmatprep.subr.bf16.mxu0 0
          %1875 = vmatpush1.bf16.msra.mxu0 %v1818
          %1876 = vmatprep.mubr.bf16.mxu0 %v1841
          %1877 = vmatmul.mubr.bf16.gmra.mrb[0].mxu0 %v1834
          %v1878 = vpop.f32.mrb[0].mxu0
          %v1879 = vadd.f32 0.0, %v1878
          %v1880 = vpop.f32.mrb[0].mxu0
          %v1881 = vpop.f32.mrb[0].mxu0
          %v1882 = vpop.f32.mrb[0].mxu0
          %1883 = vdwg.mxu0
          %v1884 = vpack.c.bf16 %v1879, %v1879
          %v1885 = vld [vmem:[%s9] sm:$0xf]
          %v1886 = vld [vmem:[%s9 + $0x4] sm:$0xf]
          %v1887 = vld [vmem:[%s9 + $0x8] sm:$0xf]
          %v1888 = vld [vmem:[%s9 + $0xc] sm:$0xf]
          %v1889 = vld [vmem:[%s9 + $0x10] sm:$0xf]
          %v1890 = vld [vmem:[%s9 + $0x14] sm:$0xf]
          %v1891 = vld [vmem:[%s9 + $0x18] sm:$0xf]
          %v1892 = vld [vmem:[%s9 + $0x1c] sm:$0xf]
          %v1893 = vld [vmem:[%s9 + $0x20] sm:$0xf]
          %v1894 = vld [vmem:[%s9 + $0x24] sm:$0xf]
          %v1895 = vld [vmem:[%s9 + $0x28] sm:$0xf]
          %v1896 = vld [vmem:[%s9 + $0x2c] sm:$0xf]
          %v1897 = vld [vmem:[%s9 + $0x30] sm:$0xf]
          %v1898 = vld [vmem:[%s9 + $0x34] sm:$0xf]
          %v1899 = vld [vmem:[%s9 + $0x38] sm:$0xf]
          %v1900 = vld [vmem:[%s9 + $0x3c] sm:$0xf]
          %v1901 = vld [vmem:[%s10] sm:$0x1]
          %v1903 = vlaneseq
          %v1904 = vshrl.u32 %v1903, 7
          %v1905 = vsub.s32 0, %v1904
          %v1906 = vrot.slane %v1901, %v1905
          %v1924 = vunpack.c.l.b16 %v1885
          %v1925 = vunpack.c.l.b16 %v1886
          %v1926 = vunpack.c.l.b16 %v1887
          %v1927 = vunpack.c.l.b16 %v1888
          %v1928 = vunpack.c.l.b16 %v1889
          %v1929 = vunpack.c.l.b16 %v1890
          %v1930 = vunpack.c.l.b16 %v1891
          %v1931 = vunpack.c.l.b16 %v1892
          %v1932 = vunpack.c.l.b16 %v1893
          %v1933 = vunpack.c.l.b16 %v1894
          %v1934 = vunpack.c.l.b16 %v1895
          %v1935 = vunpack.c.l.b16 %v1896
          %v1936 = vunpack.c.l.b16 %v1897
          %v1937 = vunpack.c.l.b16 %v1898
          %v1938 = vunpack.c.l.b16 %v1899
          %v1939 = vunpack.c.l.b16 %v1900
          %v1940 = vpack.c.b16 %v1925, %v1924
          %v1941 = vpack.c.b16 %v1927, %v1926
          %v1942 = vpack.c.b16 %v1929, %v1928
          %v1943 = vpack.c.b16 %v1931, %v1930
          %v1944 = vpack.c.b16 %v1933, %v1932
          %v1945 = vpack.c.b16 %v1935, %v1934
          %v1946 = vpack.c.b16 %v1937, %v1936
          %v1947 = vpack.c.b16 %v1939, %v1938
          %1956 = vmatprep.subr.bf16.mxu0 0
          %1957 = vmatpush1.bf16.msra.mxu0 %v1940
          %1958 = vmatprep.subr.bf16.mxu0 0
          %1959 = vmatpush1.bf16.msra.mxu0 %v1941
          %1960 = vmatprep.subr.bf16.mxu0 0
          %1961 = vmatpush1.bf16.msra.mxu0 %v1942
          %1962 = vmatprep.subr.bf16.mxu0 0
          %1963 = vmatpush1.bf16.msra.mxu0 %v1943
          %1964 = vmatprep.subr.bf16.mxu0 0
          %1965 = vmatpush1.bf16.msra.mxu0 %v1944
          %1966 = vmatprep.subr.bf16.mxu0 0
          %1967 = vmatpush1.bf16.msra.mxu0 %v1945
          %1968 = vmatprep.subr.bf16.mxu0 0
          %1969 = vmatpush1.bf16.msra.mxu0 %v1946
          %1970 = vmatprep.subr.bf16.mxu0 0
          %1971 = vmatpush1.bf16.msra.mxu0 %v1947
          %1972 = vmatprep.subr.bf16.mxu0 0
          %1973 = vmatpush1.bf16.msra.mxu0 0
          %1974 = vmatprep.subr.bf16.mxu0 0
          %1975 = vmatpush1.bf16.msra.mxu0 0
          %1976 = vmatprep.subr.bf16.mxu0 0
          %1977 = vmatpush1.bf16.msra.mxu0 0
          %1978 = vmatprep.subr.bf16.mxu0 0
          %1979 = vmatpush1.bf16.msra.mxu0 0
          %1980 = vmatprep.subr.bf16.mxu0 0
          %1981 = vmatpush1.bf16.msra.mxu0 0
          %1982 = vmatprep.subr.bf16.mxu0 0
          %1983 = vmatpush1.bf16.msra.mxu0 0
          %1984 = vmatprep.subr.bf16.mxu0 0
          %1985 = vmatpush1.bf16.msra.mxu0 0
          %1986 = vmatprep.subr.bf16.mxu0 0
          %1987 = vmatpush1.bf16.msra.mxu0 0
          %1988 = vmatprep.mubr.bf16.mxu0 0
          %1989 = vmatmul.mubr.bf16.gmra.mrb[0].mxu0 %v1884
          %v1990 = vpop.f32.mrb[0].mxu0
          %v1991 = vadd.f32 %v1906, %v1990
          %v1992 = vpop.f32.mrb[0].mxu0
          %v1993 = vpop.f32.mrb[0].mxu0
          %v1994 = vpop.f32.mrb[0].mxu0
          %1995 = vdwg.mxu0
          %v1996 = vmax.f32 %v1991, 0.0
          %v1997 = vpack.c.bf16 %v1996, %v1996
          %v1998 = vld [vmem:[%s11] sm:$0xf]
          %v1999 = vld [vmem:[%s11 + $0x4] sm:$0xf]
          %v2000 = vld [vmem:[%s11 + $0x8] sm:$0xf]
          %v2001 = vld [vmem:[%s11 + $0xc] sm:$0xf]
          %v2002 = vld [vmem:[%s11 + $0x10] sm:$0xf]
          %v2003 = vld [vmem:[%s11 + $0x14] sm:$0xf]
          %v2004 = vld [vmem:[%s11 + $0x18] sm:$0xf]
          %v2005 = vld [vmem:[%s11 + $0x1c] sm:$0xf]
          %v2006 = vld [vmem:[#allocation3] sm:$0x1]
          %v2008 = vlaneseq
          %v2009 = vshrl.u32 %v2008, 7
          %v2010 = vsub.s32 0, %v2009
          %v2011 = vrot.slane %v2006, %v2010
          %v2021 = vunpack.c.l.b16 %v1998
          %v2022 = vunpack.c.l.b16 %v1999
          %v2023 = vunpack.c.l.b16 %v2000
          %v2024 = vunpack.c.l.b16 %v2001
          %v2025 = vunpack.c.l.b16 %v2002
          %v2026 = vunpack.c.l.b16 %v2003
          %v2027 = vunpack.c.l.b16 %v2004
          %v2028 = vunpack.c.l.b16 %v2005
          %v2029 = vpack.c.b16 %v2022, %v2021
          %v2030 = vpack.c.b16 %v2024, %v2023
          %v2031 = vpack.c.b16 %v2026, %v2025
          %v2032 = vpack.c.b16 %v2028, %v2027
          %vm2037 = vcmask 523264
          %v2039 = vsel %vm2037, %v1997, 0
          %2041 = vmatprep.subr.bf16.mxu0 0
          %2042 = vmatpush1.bf16.msra.mxu0 %v2029
          %2043 = vmatprep.subr.bf16.mxu0 0
          %2044 = vmatpush1.bf16.msra.mxu0 %v2030
          %2045 = vmatprep.subr.bf16.mxu0 0
          %2046 = vmatpush1.bf16.msra.mxu0 %v2031
          %2047 = vmatprep.subr.bf16.mxu0 0
          %2048 = vmatpush1.bf16.msra.mxu0 %v2032
          %2049 = vmatprep.subr.bf16.mxu0 0
          %2050 = vmatpush1.bf16.msra.mxu0 0
          %2051 = vmatprep.subr.bf16.mxu0 0
          %2052 = vmatpush1.bf16.msra.mxu0 0
          %2053 = vmatprep.subr.bf16.mxu0 0
          %2054 = vmatpush1.bf16.msra.mxu0 0
          %2055 = vmatprep.subr.bf16.mxu0 0
          %2056 = vmatpush1.bf16.msra.mxu0 0
          %2057 = vmatprep.subr.bf16.mxu0 0
          %2058 = vmatpush1.bf16.msra.mxu0 0
          %2059 = vmatprep.subr.bf16.mxu0 0
          %2060 = vmatpush1.bf16.msra.mxu0 0
          %2061 = vmatprep.subr.bf16.mxu0 0
          %2062 = vmatpush1.bf16.msra.mxu0 0
          %2063 = vmatprep.subr.bf16.mxu0 0
          %2064 = vmatpush1.bf16.msra.mxu0 0
          %2065 = vmatprep.subr.bf16.mxu0 0
          %2066 = vmatpush1.bf16.msra.mxu0 0
          %2067 = vmatprep.subr.bf16.mxu0 0
          %2068 = vmatpush1.bf16.msra.mxu0 0
          %2069 = vmatprep.subr.bf16.mxu0 0
          %2070 = vmatpush1.bf16.msra.mxu0 0
          %2071 = vmatprep.subr.bf16.mxu0 0
          %2072 = vmatpush1.bf16.msra.mxu0 0
          %2073 = vmatprep.mubr.bf16.mxu0 0
          %2074 = vmatmul.mubr.bf16.gmra.mrb[0].mxu0 %v2039
          %v2075 = vpop.f32.mrb[0].mxu0
          %v2076 = vadd.f32 %v2011, %v2075
          %v2077 = vpop.f32.mrb[0].mxu0
          %v2078 = vpop.f32.mrb[0].mxu0
          %v2079 = vpop.f32.mrb[0].mxu0
          %2080 = vdwg.mxu0
          %vm2081 = vcmask 1024
          %2082 = vst.msk [vmem:[%s13] sm:$0x3] %vm2081, %v2076
        $region88: #{tpu_custom_call.1} parent=71 // pred_fallthru
          _
        // Predicated region
        $region89: #{tpu_custom_call.1} parent=71 // pred_check
          %p2083 = pneg %p336
        $region90: #{tpu_custom_call.1} parent=71 // pred_check_branch
          %2085 = sbr.rel (%p2083) target = $region92
        $region91: #{tpu_custom_call.1} parent=71 // pred_region
          _
        $region92: #{tpu_custom_call.1} parent=71 // pred_fallthru
          _
        // Predicated region
        $region93: #{tpu_custom_call.1} parent=71 // pred_check
          %p2086 = pneg %p336
        $region94: #{tpu_custom_call.1} parent=71 // pred_check_branch
          %2088 = sbr.rel (%p2086) target = $region96
        $region95: #{tpu_custom_call.1} parent=71 // pred_region
          _
        $region96: #{tpu_custom_call.1} parent=71 // pred_fallthru
          _
      $region72: #{tpu_custom_call.1} parent=5 // pred_fallthru
        _
      %p2089 = scmp.le.s32.totalorder 2, %s25
      // Predicated region
      $region97: #{tpu_custom_call.1} parent=5 // pred_check
        %p2090 = pneg %p2089
      $region98: #{tpu_custom_call.1} parent=5 // pred_check_branch
        %2092 = sbr.rel (%p2090) target = $region100
      $region99: #{tpu_custom_call.1} parent=5 // pred_region
        %s2093 = ssub.s32 %s25, 2
      $region100: #{tpu_custom_call.1} parent=5 // pred_fallthru
        _
    $region6: #{tpu_custom_call.1} parent=1 // loop_footer
      %s29 = sadd.s32 1, %s25
    $region7: #{tpu_custom_call.1} parent=1 // loop_footer_branch
      %24 = sbr.rel target = $region3
    $region8: #{tpu_custom_call.1} parent=1 // loop_exit
      _
    %2094 = vsyncpa [#allocation5], 1
    %s2095 = scalar_lea.sflag [#allocation5], 1
    %2096 = vsyncpa %s2095, 1
    %2097 = vsyncpa [#allocation7], 1
    %s2098 = scalar_lea.sflag [#allocation7], 1
    %2099 = vsyncpa %s2098, 1

</llo_original>
